<compile_context>
chip_gen: v5e
topology: v5e:2x2
jax: 0.10.0
libtpu: 0.0.40
codegen_flags: <defaults>
</compile_context>

<pallas_src>
import math

import jax
import jax.numpy as jnp
from jax.experimental import pallas as pl
from jax.experimental.pallas import tpu as pltpu

_EPS = 1e-5  # torch.nn.InstanceNorm1d default eps

_LAYER_PARAM_KEYS = ('wq', 'wk', 'wv', 'wv2', 'wcomb', 'bcomb',
                     'g1', 'b1', 'w1', 'bf1', 'w2', 'bf2', 'g2', 'b2')


def _gelu_tanh(x):
    # TODO(synk): PyTorch F.gelu defaults to the exact erf formulation; the tanh
    # approximation is used here (TPU EUP friendly) and in the reference for parity.
    c = 0.7978845608028654  # sqrt(2/pi)
    return 0.5 * x * (1.0 + jnp.tanh(c * (x + 0.044715 * x * x * x)))


def _addnorm_rows(x, y, gamma, beta, eps):
    """Add + InstanceNorm1d over the sequence axis (rows) of a (T, E) tile."""
    s = x + y
    mu = jnp.mean(s, axis=0, keepdims=True)             # (1, E)
    d = s - mu
    var = jnp.mean(d * d, axis=0, keepdims=True)        # biased, like InstanceNorm1d
    return d * jax.lax.rsqrt(var + eps) * gamma + beta


# ----------------------------------------------------------------------------
# Pallas kernel: one encoder/fusion layer for a block of batch elements
# ----------------------------------------------------------------------------
def _layer_kernel_body(xq_ref, xkv_ref,
                       wq_ref, wk_ref, wv_ref, wv2_ref, wcomb_ref, bcomb_ref,
                       g1_ref, b1_ref, w1_ref, bf1_ref, w2_ref, bf2_ref,
                       g2_ref, b2_ref, out_ref,
                       *, head_num, qkv_dim, add_start, eps):
    H, D = head_num, qkv_dim
    bt, tq, e_dim = xq_ref.shape
    inv_sqrt_d = 1.0 / math.sqrt(float(D))

    # Weights loaded once per grid step, reused across the batch block & heads.
    wq = wq_ref[...]
    wk = wk_ref[...]
    wv = wv_ref[...]
    wv2 = wv2_ref[...]
    wcomb = wcomb_ref[...]
    bcomb = bcomb_ref[...]
    g1 = g1_ref[...]
    b1 = b1_ref[...]
    w1 = w1_ref[...]
    bf1 = bf1_ref[...]
    w2 = w2_ref[...]
    bf2 = bf2_ref[...]
    g2 = g2_ref[...]
    b2 = b2_ref[...]

    # Row masks: rows [add_start, tq-1) receive the pref-node add; row tq-1 is
    # the pref node itself (used to extract it without an unaligned slice).
    rows = jax.lax.broadcasted_iota(jnp.int32, (tq, 1), 0)
    add_mask = jnp.logical_and(rows >= add_start, rows < tq - 1).astype(jnp.float32)
    last_mask = (rows == tq - 1).astype(jnp.float32)

    self_kv = xkv_ref is xq_ref

    for b in range(bt):                          # static unroll over batch block
        xq_b = xq_ref[b]                         # (tq, E)
        xkv_b = xq_b if self_kv else xkv_ref[b]  # (tkv, E)

        # Lane-dense projections; 1/sqrt(D) folded into q once.
        q = jnp.dot(xq_b, wq, preferred_element_type=jnp.float32) * inv_sqrt_d
        k = jnp.dot(xkv_b, wk, preferred_element_type=jnp.float32)
        v = jnp.dot(xkv_b, wv, preferred_element_type=jnp.float32)

        # Multi-head attention; combine projection accumulated per head
        # (no concat of D-wide head fragments, no transposes).
        mh = jnp.zeros((tq, e_dim), jnp.float32)
        for h in range(H):
            sl = slice(h * D, (h + 1) * D)
            qh = q[:, sl]
            kh = k[:, sl]
            vh = v[:, sl]
            s = jax.lax.dot_general(qh, kh, (((1,), (1,)), ((), ())),
                                    preferred_element_type=jnp.float32)  # (tq, tkv)
            m = jnp.max(s, axis=-1, keepdims=True)
            p = jnp.exp(s - m)
            w_att = p / jnp.sum(p, axis=-1, keepdims=True)
            oh = jnp.dot(w_att, vh, preferred_element_type=jnp.float32)  # (tq, D)
            mh = mh + jnp.dot(oh, wcomb[sl, :],
                              preferred_element_type=jnp.float32)        # (tq, E)
        mh = mh + bcomb

        # Single-key attention branch == Wv2(pref) (softmax over 1 key == 1),
        # pushed through the (linear) combine and added on rows [add_start, tq-1).
        pref = jnp.sum(xq_b * last_mask, axis=0, keepdims=True)          # (1, E)
        v2c = jnp.dot(jnp.dot(pref, wv2, preferred_element_type=jnp.float32),
                      wcomb, preferred_element_type=jnp.float32)         # (1, E)
        mh = mh + add_mask * v2c

        # Add & InstanceNorm 1, GELU feed-forward, Add & InstanceNorm 2.
        out1 = _addnorm_rows(xq_b, mh, g1, b1, eps)
        hid = jnp.dot(out1, w1, preferred_element_type=jnp.float32) + bf1
        ffo = jnp.dot(_gelu_tanh(hid), w2, preferred_element_type=jnp.float32) + bf2
        out_ref[b] = _addnorm_rows(out1, ffo, g2, b2, eps)


def _make_layer_kernel(self_kv, **static):
    if self_kv:
        def kernel(x_ref, *rest):
            _layer_kernel_body(x_ref, x_ref, *rest, **static)
    else:
        def kernel(xq_ref, xkv_ref, *rest):
            _layer_kernel_body(xq_ref, xkv_ref, *rest, **static)
    return kernel


def _pick_block_batch(batch, tq, target_rows=256):
    """Batch elements per grid step: amortize per-step overhead while keeping
    the grid >= 2 steps so both v7x TensorCores get work."""
    bt = min(batch, max(1, target_rows // max(tq, 1)))
    while bt > 1 and (batch % bt != 0 or batch // bt < 2):
        bt -= 1
    return max(bt, 1)


def _apply_layer_pallas(xq, xkv, params, add_start, head_num, qkv_dim):
    batch, tq, e_dim = xq.shape
    bt = _pick_block_batch(batch, tq)
    grid = (batch // bt,)

    weights = [params[k] for k in _LAYER_PARAM_KEYS]
    inputs = [xq]
    in_specs = [pl.BlockSpec((bt, tq, e_dim), lambda g: (g, 0, 0))]
    if xkv is not None:
        tkv = xkv.shape[1]
        inputs.append(xkv)
        in_specs.append(pl.BlockSpec((bt, tkv, e_dim), lambda g: (g, 0, 0)))
    in_specs += [pl.BlockSpec(w.shape, lambda g: (0, 0)) for w in weights]
    inputs += weights

    out_spec = pl.BlockSpec((bt, tq, e_dim), lambda g: (g, 0, 0))

    # Per-step VMEM: double-buffered data blocks + resident weights (+ slack),
    # clamped to 32 MiB which is safe on v5e / v6e / v7x.
    data_bytes = 4 * bt * e_dim * (2 * tq + (xkv.shape[1] if xkv is not None else 0))
    weight_bytes = 4 * sum(int(w.size) for w in weights)
    vmem_limit = int(min(max(2 * data_bytes + weight_bytes + (2 << 20), 8 << 20),
                         32 << 20))

    kernel = _make_layer_kernel(self_kv=(xkv is None),
                                head_num=head_num, qkv_dim=qkv_dim,
                                add_start=add_start, eps=_EPS)

    return pl.pallas_call(
        kernel,
        out_shape=jax.ShapeDtypeStruct((batch, tq, e_dim), jnp.float32),
        grid=grid,
        in_specs=in_specs,
        out_specs=out_spec,
        compiler_params=pltpu.CompilerParams(
            dimension_semantics=("parallel",),
            vmem_limit_bytes=vmem_limit),
    )(*inputs)


# ----------------------------------------------------------------------------
# Pure-JAX reference (mirrors the PyTorch layer math; used only to validate)
# ----------------------------------------------------------------------------
def _ref_heads(x, head_num):
    b, n, hd = x.shape
    return x.reshape(b, n, head_num, hd // head_num).transpose(0, 2, 1, 3)


def _ref_mha(q, k, v):
    d = q.shape[-1]
    score = jnp.einsum('bhnd,bhsd->bhns', q, k) / jnp.sqrt(jnp.float32(d))
    w = jax.nn.softmax(score, axis=-1)
    out = jnp.einsum('bhns,bhsd->bhnd', w, v)
    b, h, n, dd = out.shape
    return out.transpose(0, 2, 1, 3).reshape(b, n, h * dd)


def _ref_add_norm(a, b, gamma, beta, eps=_EPS):
    s = a + b
    mu = jnp.mean(s, axis=1, keepdims=True)
    var = jnp.mean((s - mu) ** 2, axis=1, keepdims=True)
    return (s - mu) / jnp.sqrt(var + eps) * gamma + beta


def _apply_layer_reference(xq, xkv, params, add_start, head_num, qkv_dim):
    if xkv is None:
        xkv = xq
    q1 = _ref_heads(xq @ params['wq'], head_num)
    k1 = _ref_heads(xkv @ params['wk'], head_num)
    v1 = _ref_heads(xkv @ params['wv'], head_num)
    out_concat = _ref_mha(q1, k1, v1)                       # (B, Tq, H*D)
    pref = xq[:, -1:, :]                                    # (B, 1, E)
    # softmax over the single pref key is exactly 1 -> second MHA == Wv2(pref)
    upd = out_concat[:, add_start:-1, :] + pref @ params['wv2']
    out_concat = out_concat.at[:, add_start:-1, :].set(upd)
    mh = out_concat @ params['wcomb'] + params['bcomb']
    out1 = _ref_add_norm(xq, mh, params['g1'], params['b1'])
    ffo = _gelu_tanh(out1 @ params['w1'] + params['bf1']) @ params['w2'] + params['bf2']
    return _ref_add_norm(out1, ffo, params['g2'], params['b2'])


# ----------------------------------------------------------------------------
# Module-like wrapper
# ----------------------------------------------------------------------------
class CVRPEncoderPallas:
    def __init__(self, *, embedding_dim, head_num, qkv_dim, ff_hidden_dim,
                 encoder_layer_num, fusion_layer_num, bn_num, bn_img_num,
                 patch_size, in_channels, key):
        self.embedding_dim = embedding_dim
        self.head_num = head_num
        self.qkv_dim = qkv_dim
        self.ff_hidden_dim = ff_hidden_dim
        self.encoder_layer_num = encoder_layer_num
        self.fusion_layer_num = fusion_layer_num
        self.bn_num = bn_num
        self.bn_img_num = bn_img_num
        self.patch_size = patch_size
        self.in_channels = in_channels

        n_plain = encoder_layer_num - fusion_layer_num
        total_keys = 6 + 2 * n_plain + 2 * fusion_layer_num + 2
        keys = iter(jax.random.split(key, total_keys))

        E = embedding_dim
        self.embedding_depot = self._linear(next(keys), 2, E)
        self.embedding_node = self._linear(next(keys), 3, E)
        self.embedding_pref = self._linear(next(keys), 2, E)
        patch_in = patch_size * patch_size * in_channels
        self.patch_proj = self._linear(next(keys), patch_in, E)
        self.patch_pos1 = self._linear(next(keys), 2, E)
        self.patch_pos2 = self._linear(next(keys), E, E)

        self.layers = [self._layer_params(next(keys)) for _ in range(n_plain)]
        self.layers_img = [self._layer_params(next(keys)) for _ in range(n_plain)]
        self.fusion_layers = [
            {'main': self._layer_params(next(keys)),
             'img': self._layer_params(next(keys))}
            for _ in range(fusion_layer_num)]

        self.fcp = jax.random.normal(next(keys), (1, bn_num, E), jnp.float32)
        self.fcp_img = jax.random.normal(next(keys), (1, bn_img_num, E), jnp.float32)

    # -- parameter builders ---------------------------------------------------
    @staticmethod
    def _linear(key, fan_in, fan_out):
        kw, kb = jax.random.split(key)
        w = jax.random.normal(kw, (fan_in, fan_out), jnp.float32) / math.sqrt(fan_in)
        b = 0.01 * jax.random.normal(kb, (1, fan_out), jnp.float32)
        return {'w': w, 'b': b}

    def _layer_params(self, key):
        E, H, D, F = self.embedding_dim, self.head_num, self.qkv_dim, self.ff_hidden_dim
        HD = H * D
        ks = jax.random.split(key, 14)

        def w(k, i, o):
            return jax.random.normal(k, (i, o), jnp.float32) / math.sqrt(i)

        def vec(k, n, loc=0.0, scale=0.05):
            return loc + scale * jax.random.normal(k, (1, n), jnp.float32)

        # Wq2 / Wk2 of the reference module are mathematically inert
        # (softmax over a single key == 1), so they are not materialized.
        return {
            'wq': w(ks[0], E, HD), 'wk': w(ks[1], E, HD), 'wv': w(ks[2], E, HD),
            'wv2': w(ks[3], E, HD),
            'wcomb': w(ks[4], HD, E), 'bcomb': vec(ks[5], E),
            'g1': vec(ks[6], E, loc=1.0), 'b1': vec(ks[7], E),
            'w1': w(ks[8], E, F), 'bf1': vec(ks[9], F),
            'w2': w(ks[10], F, E), 'bf2': vec(ks[11], E),
            'g2': vec(ks[12], E, loc=1.0), 'b2': vec(ks[13], E),
        }

    # -- frontend glue (tiny one-off embeddings, plain JAX) -------------------
    def _patch_embedding(self, img):
        b, c, hh, ww = img.shape
        ps = self.patch_size
        ph, pw = hh // ps, ww // ps
        x = img.reshape(b, c, ph, ps, pw, ps)
        x = jnp.transpose(x, (0, 2, 4, 1, 3, 5)).reshape(b, ph * pw, c * ps * ps)
        emb = x @ self.patch_proj['w'] + self.patch_proj['b']
        gx, gy = jnp.meshgrid(jnp.arange(ph), jnp.arange(pw), indexing='ij')
        xy = jnp.stack([gx, gy], axis=-1).reshape(1, ph * pw, 2).astype(jnp.float32)
        xy = xy / float(max(ph - 1, 1))
        pos = jnp.maximum(xy @ self.patch_pos1['w'] + self.patch_pos1['b'], 0.0)
        pos = pos @ self.patch_pos2['w'] + self.patch_pos2['b']
        return emb + pos

    def _embed(self, depot_xy, node_xy_demand, pref, img):
        d = depot_xy @ self.embedding_depot['w'] + self.embedding_depot['b']
        n = node_xy_demand @ self.embedding_node['w'] + self.embedding_node['b']
        p = pref @ self.embedding_pref['w'] + self.embedding_pref['b']   # (B, E)
        patches = self._patch_embedding(img)
        out = jnp.concatenate([d, n, p[:, None, :]], axis=1)             # (B, S1, E)
        out_img = jnp.concatenate([patches, p[:, None, :]], axis=1)      # (B, S2, E)
        return out, out_img

    # -- forward --------------------------------------------------------------
    def _forward_impl(self, depot_xy, node_xy_demand, pref, img, layer_fn):
        H, D = self.head_num, self.qkv_dim
        out, out_img = self._embed(depot_xy, node_xy_demand, pref, img)
        n_plain = self.encoder_layer_num - self.fusion_layer_num
        for i in range(n_plain):
            out = layer_fn(out, None, self.layers[i], 0, H, D)
            out_img = layer_fn(out_img, None, self.layers_img[i], 0, H, D)
        batch = out.shape[0]
        fcp = jnp.broadcast_to(self.fcp, (batch,) + self.fcp.shape[1:])
        fcp_img = jnp.broadcast_to(self.fcp_img, (batch,) + self.fcp_img.shape[1:])
        for layer in self.fusion_layers:
            in1 = jnp.concatenate([fcp, out], axis=1)
            in1_img = jnp.concatenate([fcp_img, out_img], axis=1)
            kv1 = jnp.concatenate([in1, fcp_img], axis=1)
            kv1_img = jnp.concatenate([in1_img, fcp], axis=1)
            o3 = layer_fn(in1, kv1, layer['main'], self.bn_num, H, D)
            o3_img = layer_fn(in1_img, kv1_img, layer['img'], self.bn_img_num, H, D)
            out, fcp = o3[:, self.bn_num:], o3[:, :self.bn_num]
            out_img, fcp_img = o3_img[:, self.bn_img_num:], o3_img[:, :self.bn_img_num]
        return jnp.concatenate([out[:, :-1], out_img[:, :-1]], axis=1)

    def forward(self, depot_xy, node_xy_demand, pref, img):
        return self._forward_impl(depot_xy, node_xy_demand, pref, img,
                                  _apply_layer_pallas)

    def forward_reference(self, depot_xy, node_xy_demand, pref, img):
        return self._forward_impl(depot_xy, node_xy_demand, pref, img,
                                  _apply_layer_reference)


# ----------------------------------------------------------------------------
if __name__ == "__main__":
    # Small shapes consistent with the module.
    B = 2            # batch
    N = 6            # customer nodes -> node sequence = 1 depot + N + 1 pref = 8
    E = 32           # embedding_dim
    H = 4            # head_num
    D = 8            # qkv_dim
    F = 64           # ff_hidden_dim
    encoder_layer_num = 3
    fusion_layer_num = 1
    bn_num = 2
    bn_img_num = 3
    patch_size = 4
    in_channels = 2
    img_hw = 16      # -> 4x4 = 16 patches

    root = jax.random.PRNGKey(0)
    kp, k1, k2, k3, k4 = jax.random.split(root, 5)

    enc = CVRPEncoderPallas(
        embedding_dim=E, head_num=H, qkv_dim=D, ff_hidden_dim=F,
        encoder_layer_num=encoder_layer_num, fusion_layer_num=fusion_layer_num,
        bn_num=bn_num, bn_img_num=bn_img_num,
        patch_size=patch_size, in_channels=in_channels, key=kp)

    depot_xy = jax.random.uniform(k1, (B, 1, 2), jnp.float32)
    node_xy_demand = jax.random.uniform(k2, (B, N, 3), jnp.float32)
    pref = jax.random.uniform(k3, (B, 2), jnp.float32)
    img = jax.random.uniform(k4, (B, in_channels, img_hw, img_hw), jnp.float32)

    out = jax.block_until_ready(enc.forward(depot_xy, node_xy_demand, pref, img))
    ref = jax.block_until_ready(
        enc.forward_reference(depot_xy, node_xy_demand, pref, img))

    S1 = 1 + N + 1
    S2 = (img_hw // patch_size) ** 2 + 1
    assert out.shape == (B, (S1 - 1) + (S2 - 1), E), out.shape
    assert bool(jnp.all(jnp.isfinite(out)))
    max_diff = float(jnp.max(jnp.abs(out - ref)))
    # tolerance covers possible MXU f32 pass-count differences between Mosaic
    # matmuls and XLA's default-precision reference matmuls
    assert bool(jnp.allclose(out, ref, atol=2e-2, rtol=2e-2)), max_diff

    print("KERNEL_OK")
</pallas_src>

<mosaic_0001>
module attributes {stable_mosaic.version = 11 : i64} {
  func.func @kernel(%arg0: i32, %arg1: memref<1x8x32xf32, #tpu.memory_space<vmem>>, %arg2: memref<32x32xf32, #tpu.memory_space<vmem>>, %arg3: memref<32x32xf32, #tpu.memory_space<vmem>>, %arg4: memref<32x32xf32, #tpu.memory_space<vmem>>, %arg5: memref<32x32xf32, #tpu.memory_space<vmem>>, %arg6: memref<32x32xf32, #tpu.memory_space<vmem>>, %arg7: memref<1x32xf32, #tpu.memory_space<vmem>>, %arg8: memref<1x32xf32, #tpu.memory_space<vmem>>, %arg9: memref<1x32xf32, #tpu.memory_space<vmem>>, %arg10: memref<32x64xf32, #tpu.memory_space<vmem>>, %arg11: memref<1x64xf32, #tpu.memory_space<vmem>>, %arg12: memref<64x32xf32, #tpu.memory_space<vmem>>, %arg13: memref<1x32xf32, #tpu.memory_space<vmem>>, %arg14: memref<1x32xf32, #tpu.memory_space<vmem>>, %arg15: memref<1x32xf32, #tpu.memory_space<vmem>>, %arg16: memref<1x8x32xf32, #tpu.memory_space<vmem>>) attributes {dimension_semantics = [#tpu.dimension_semantics<parallel>], iteration_bounds = array<i64: 2>, scalar_prefetch = 0 : i64, scratch_operands = 0 : i64, tpu.core_type = #tpu.core_type<tc>, window_params = [{transform_indices = @transform_0, window_bounds = array<i64: 1, 8, 32>}, {pipeline_mode = #tpu.pipeline_mode<synchronous>, transform_indices = @transform_1, window_bounds = array<i64: 32, 32>}, {pipeline_mode = #tpu.pipeline_mode<synchronous>, transform_indices = @transform_2, window_bounds = array<i64: 32, 32>}, {pipeline_mode = #tpu.pipeline_mode<synchronous>, transform_indices = @transform_3, window_bounds = array<i64: 32, 32>}, {pipeline_mode = #tpu.pipeline_mode<synchronous>, transform_indices = @transform_4, window_bounds = array<i64: 32, 32>}, {pipeline_mode = #tpu.pipeline_mode<synchronous>, transform_indices = @transform_5, window_bounds = array<i64: 32, 32>}, {pipeline_mode = #tpu.pipeline_mode<synchronous>, transform_indices = @transform_6, window_bounds = array<i64: 1, 32>}, {pipeline_mode = #tpu.pipeline_mode<synchronous>, transform_indices = @transform_7, window_bounds = array<i64: 1, 32>}, {pipeline_mode = #tpu.pipeline_mode<synchronous>, transform_indices = @transform_8, window_bounds = array<i64: 1, 32>}, {pipeline_mode = #tpu.pipeline_mode<synchronous>, transform_indices = @transform_9, window_bounds = array<i64: 32, 64>}, {pipeline_mode = #tpu.pipeline_mode<synchronous>, transform_indices = @transform_10, window_bounds = array<i64: 1, 64>}, {pipeline_mode = #tpu.pipeline_mode<synchronous>, transform_indices = @transform_11, window_bounds = array<i64: 64, 32>}, {pipeline_mode = #tpu.pipeline_mode<synchronous>, transform_indices = @transform_12, window_bounds = array<i64: 1, 32>}, {pipeline_mode = #tpu.pipeline_mode<synchronous>, transform_indices = @transform_13, window_bounds = array<i64: 1, 32>}, {pipeline_mode = #tpu.pipeline_mode<synchronous>, transform_indices = @transform_14, window_bounds = array<i64: 1, 32>}, {transform_indices = @transform_15, window_bounds = array<i64: 1, 8, 32>}]} {
    %c0 = arith.constant 0 : index
    %c0_0 = arith.constant 0 : index
    %0 = vector.load %arg2[%c0, %c0_0] : memref<32x32xf32, #tpu.memory_space<vmem>>, vector<32x32xf32>
    %c0_1 = arith.constant 0 : index
    %c0_2 = arith.constant 0 : index
    %1 = vector.load %arg3[%c0_1, %c0_2] : memref<32x32xf32, #tpu.memory_space<vmem>>, vector<32x32xf32>
    %c0_3 = arith.constant 0 : index
    %c0_4 = arith.constant 0 : index
    %2 = vector.load %arg4[%c0_3, %c0_4] : memref<32x32xf32, #tpu.memory_space<vmem>>, vector<32x32xf32>
    %c0_5 = arith.constant 0 : index
    %c0_6 = arith.constant 0 : index
    %3 = vector.load %arg5[%c0_5, %c0_6] : memref<32x32xf32, #tpu.memory_space<vmem>>, vector<32x32xf32>
    %c0_7 = arith.constant 0 : index
    %c0_8 = arith.constant 0 : index
    %4 = vector.load %arg6[%c0_7, %c0_8] : memref<32x32xf32, #tpu.memory_space<vmem>>, vector<32x32xf32>
    %c0_9 = arith.constant 0 : index
    %c0_10 = arith.constant 0 : index
    %5 = vector.load %arg7[%c0_9, %c0_10] : memref<1x32xf32, #tpu.memory_space<vmem>>, vector<1x32xf32>
    %c0_11 = arith.constant 0 : index
    %c0_12 = arith.constant 0 : index
    %6 = vector.load %arg8[%c0_11, %c0_12] : memref<1x32xf32, #tpu.memory_space<vmem>>, vector<1x32xf32>
    %c0_13 = arith.constant 0 : index
    %c0_14 = arith.constant 0 : index
    %7 = vector.load %arg9[%c0_13, %c0_14] : memref<1x32xf32, #tpu.memory_space<vmem>>, vector<1x32xf32>
    %c0_15 = arith.constant 0 : index
    %c0_16 = arith.constant 0 : index
    %8 = vector.load %arg10[%c0_15, %c0_16] : memref<32x64xf32, #tpu.memory_space<vmem>>, vector<32x64xf32>
    %c0_17 = arith.constant 0 : index
    %c0_18 = arith.constant 0 : index
    %9 = vector.load %arg11[%c0_17, %c0_18] : memref<1x64xf32, #tpu.memory_space<vmem>>, vector<1x64xf32>
    %c0_19 = arith.constant 0 : index
    %c0_20 = arith.constant 0 : index
    %10 = vector.load %arg12[%c0_19, %c0_20] : memref<64x32xf32, #tpu.memory_space<vmem>>, vector<64x32xf32>
    %c0_21 = arith.constant 0 : index
    %c0_22 = arith.constant 0 : index
    %11 = vector.load %arg13[%c0_21, %c0_22] : memref<1x32xf32, #tpu.memory_space<vmem>>, vector<1x32xf32>
    %c0_23 = arith.constant 0 : index
    %c0_24 = arith.constant 0 : index
    %12 = vector.load %arg14[%c0_23, %c0_24] : memref<1x32xf32, #tpu.memory_space<vmem>>, vector<1x32xf32>
    %c0_25 = arith.constant 0 : index
    %c0_26 = arith.constant 0 : index
    %13 = vector.load %arg15[%c0_25, %c0_26] : memref<1x32xf32, #tpu.memory_space<vmem>>, vector<1x32xf32>
    %14 = tpu.iota {dimensions = array<i32: 0>} : vector<8x1xi32>
    %c0_i32 = arith.constant 0 : i32
    %15 = vector.broadcast %c0_i32 : i32 to vector<8x1xi32>
    %16 = arith.cmpi sge, %14, %15 : vector<8x1xi32>
    %c7_i32 = arith.constant 7 : i32
    %17 = vector.broadcast %c7_i32 : i32 to vector<8x1xi32>
    %18 = arith.cmpi slt, %14, %17 : vector<8x1xi32>
    %19 = arith.andi %16, %18 : vector<8x1xi1>
    %20 = arith.extui %19 : vector<8x1xi1> to vector<8x1xi32>
    %21 = arith.sitofp %20 : vector<8x1xi32> to vector<8x1xf32>
    %c7_i32_27 = arith.constant 7 : i32
    %22 = vector.broadcast %c7_i32_27 : i32 to vector<8x1xi32>
    %23 = arith.cmpi eq, %14, %22 : vector<8x1xi32>
    %24 = arith.extui %23 : vector<8x1xi1> to vector<8x1xi32>
    %25 = arith.sitofp %24 : vector<8x1xi32> to vector<8x1xf32>
    %c0_28 = arith.constant 0 : index
    %c0_29 = arith.constant 0 : index
    %c0_30 = arith.constant 0 : index
    %26 = vector.load %arg1[%c0_28, %c0_29, %c0_30] : memref<1x8x32xf32, #tpu.memory_space<vmem>>, vector<1x8x32xf32>
    %27 = vector.shape_cast %26 : vector<1x8x32xf32> to vector<8x32xf32>
    %cst = arith.constant dense<0.000000e+00> : vector<8x32xf32>
    %28 = tpu.matmul %27, %0, %cst {dimension_numbers = #tpu.dot_dimension_numbers<[1], [0], [0], [1], [0, 0, 1, 1], [], []>} : vector<8x32xf32>, vector<32x32xf32>, vector<8x32xf32> -> vector<8x32xf32>
    %cst_31 = arith.constant 0.353553385 : f32
    %29 = vector.broadcast %cst_31 : f32 to vector<8x32xf32>
    %30 = arith.mulf %28, %29 : vector<8x32xf32>
    %cst_32 = arith.constant dense<0.000000e+00> : vector<8x32xf32>
    %31 = tpu.matmul %27, %1, %cst_32 {dimension_numbers = #tpu.dot_dimension_numbers<[1], [0], [0], [1], [0, 0, 1, 1], [], []>} : vector<8x32xf32>, vector<32x32xf32>, vector<8x32xf32> -> vector<8x32xf32>
    %cst_33 = arith.constant dense<0.000000e+00> : vector<8x32xf32>
    %32 = tpu.matmul %27, %2, %cst_33 {dimension_numbers = #tpu.dot_dimension_numbers<[1], [0], [0], [1], [0, 0, 1, 1], [], []>} : vector<8x32xf32>, vector<32x32xf32>, vector<8x32xf32> -> vector<8x32xf32>
    %cst_34 = arith.constant 0.000000e+00 : f32
    %33 = vector.broadcast %cst_34 : f32 to vector<8x32xf32>
    %34 = vector.extract_strided_slice %30 {offsets = [0, 0], sizes = [8, 8], strides = [1, 1]} : vector<8x32xf32> to vector<8x8xf32>
    %35 = vector.extract_strided_slice %31 {offsets = [0, 0], sizes = [8, 8], strides = [1, 1]} : vector<8x32xf32> to vector<8x8xf32>
    %36 = vector.extract_strided_slice %32 {offsets = [0, 0], sizes = [8, 8], strides = [1, 1]} : vector<8x32xf32> to vector<8x8xf32>
    %cst_35 = arith.constant dense<0.000000e+00> : vector<8x8xf32>
    %37 = tpu.matmul %34, %35, %cst_35 {dimension_numbers = #tpu.dot_dimension_numbers<[1], [1], [0], [0], [0, 0, 1, 0], [], []>} : vector<8x8xf32>, vector<8x8xf32>, vector<8x8xf32> -> vector<8x8xf32>
    %cst_36 = arith.constant dense<0xFF800000> : vector<8xf32>
    %38 = vector.multi_reduction <maximumf>, %37, %cst_36 [1] : vector<8x8xf32> to vector<8xf32>
    %39 = vector.shape_cast %38 : vector<8xf32> to vector<8x1xf32>
    %40 = vector.broadcast %39 : vector<8x1xf32> to vector<8x8xf32>
    %41 = arith.subf %37, %40 : vector<8x8xf32>
    %42 = math.exp %41 : vector<8x8xf32>
    %cst_37 = arith.constant dense<0.000000e+00> : vector<8xf32>
    %43 = vector.multi_reduction <add>, %42, %cst_37 [1] : vector<8x8xf32> to vector<8xf32>
    %44 = vector.shape_cast %43 : vector<8xf32> to vector<8x1xf32>
    %45 = vector.broadcast %44 : vector<8x1xf32> to vector<8x8xf32>
    %46 = arith.divf %42, %45 : vector<8x8xf32>
    %cst_38 = arith.constant dense<0.000000e+00> : vector<8x8xf32>
    %47 = tpu.matmul %46, %36, %cst_38 {dimension_numbers = #tpu.dot_dimension_numbers<[1], [0], [0], [1], [0, 0, 1, 1], [], []>} : vector<8x8xf32>, vector<8x8xf32>, vector<8x8xf32> -> vector<8x8xf32>
    %48 = vector.extract_strided_slice %4 {offsets = [0, 0], sizes = [8, 32], strides = [1, 1]} : vector<32x32xf32> to vector<8x32xf32>
    %cst_39 = arith.constant dense<0.000000e+00> : vector<8x32xf32>
    %49 = tpu.matmul %47, %48, %cst_39 {dimension_numbers = #tpu.dot_dimension_numbers<[1], [0], [0], [1], [0, 0, 1, 1], [], []>} : vector<8x8xf32>, vector<8x32xf32>, vector<8x32xf32> -> vector<8x32xf32>
    %50 = arith.addf %33, %49 : vector<8x32xf32>
    %51 = vector.extract_strided_slice %30 {offsets = [0, 8], sizes = [8, 8], strides = [1, 1]} : vector<8x32xf32> to vector<8x8xf32>
    %52 = vector.extract_strided_slice %31 {offsets = [0, 8], sizes = [8, 8], strides = [1, 1]} : vector<8x32xf32> to vector<8x8xf32>
    %53 = vector.extract_strided_slice %32 {offsets = [0, 8], sizes = [8, 8], strides = [1, 1]} : vector<8x32xf32> to vector<8x8xf32>
    %cst_40 = arith.constant dense<0.000000e+00> : vector<8x8xf32>
    %54 = tpu.matmul %51, %52, %cst_40 {dimension_numbers = #tpu.dot_dimension_numbers<[1], [1], [0], [0], [0, 0, 1, 0], [], []>} : vector<8x8xf32>, vector<8x8xf32>, vector<8x8xf32> -> vector<8x8xf32>
    %cst_41 = arith.constant dense<0xFF800000> : vector<8xf32>
    %55 = vector.multi_reduction <maximumf>, %54, %cst_41 [1] : vector<8x8xf32> to vector<8xf32>
    %56 = vector.shape_cast %55 : vector<8xf32> to vector<8x1xf32>
    %57 = vector.broadcast %56 : vector<8x1xf32> to vector<8x8xf32>
    %58 = arith.subf %54, %57 : vector<8x8xf32>
    %59 = math.exp %58 : vector<8x8xf32>
    %cst_42 = arith.constant dense<0.000000e+00> : vector<8xf32>
    %60 = vector.multi_reduction <add>, %59, %cst_42 [1] : vector<8x8xf32> to vector<8xf32>
    %61 = vector.shape_cast %60 : vector<8xf32> to vector<8x1xf32>
    %62 = vector.broadcast %61 : vector<8x1xf32> to vector<8x8xf32>
    %63 = arith.divf %59, %62 : vector<8x8xf32>
    %cst_43 = arith.constant dense<0.000000e+00> : vector<8x8xf32>
    %64 = tpu.matmul %63, %53, %cst_43 {dimension_numbers = #tpu.dot_dimension_numbers<[1], [0], [0], [1], [0, 0, 1, 1], [], []>} : vector<8x8xf32>, vector<8x8xf32>, vector<8x8xf32> -> vector<8x8xf32>
    %65 = vector.extract_strided_slice %4 {offsets = [8, 0], sizes = [8, 32], strides = [1, 1]} : vector<32x32xf32> to vector<8x32xf32>
    %cst_44 = arith.constant dense<0.000000e+00> : vector<8x32xf32>
    %66 = tpu.matmul %64, %65, %cst_44 {dimension_numbers = #tpu.dot_dimension_numbers<[1], [0], [0], [1], [0, 0, 1, 1], [], []>} : vector<8x8xf32>, vector<8x32xf32>, vector<8x32xf32> -> vector<8x32xf32>
    %67 = arith.addf %50, %66 : vector<8x32xf32>
    %68 = vector.extract_strided_slice %30 {offsets = [0, 16], sizes = [8, 8], strides = [1, 1]} : vector<8x32xf32> to vector<8x8xf32>
    %69 = vector.extract_strided_slice %31 {offsets = [0, 16], sizes = [8, 8], strides = [1, 1]} : vector<8x32xf32> to vector<8x8xf32>
    %70 = vector.extract_strided_slice %32 {offsets = [0, 16], sizes = [8, 8], strides = [1, 1]} : vector<8x32xf32> to vector<8x8xf32>
    %cst_45 = arith.constant dense<0.000000e+00> : vector<8x8xf32>
    %71 = tpu.matmul %68, %69, %cst_45 {dimension_numbers = #tpu.dot_dimension_numbers<[1], [1], [0], [0], [0, 0, 1, 0], [], []>} : vector<8x8xf32>, vector<8x8xf32>, vector<8x8xf32> -> vector<8x8xf32>
    %cst_46 = arith.constant dense<0xFF800000> : vector<8xf32>
    %72 = vector.multi_reduction <maximumf>, %71, %cst_46 [1] : vector<8x8xf32> to vector<8xf32>
    %73 = vector.shape_cast %72 : vector<8xf32> to vector<8x1xf32>
    %74 = vector.broadcast %73 : vector<8x1xf32> to vector<8x8xf32>
    %75 = arith.subf %71, %74 : vector<8x8xf32>
    %76 = math.exp %75 : vector<8x8xf32>
    %cst_47 = arith.constant dense<0.000000e+00> : vector<8xf32>
    %77 = vector.multi_reduction <add>, %76, %cst_47 [1] : vector<8x8xf32> to vector<8xf32>
    %78 = vector.shape_cast %77 : vector<8xf32> to vector<8x1xf32>
    %79 = vector.broadcast %78 : vector<8x1xf32> to vector<8x8xf32>
    %80 = arith.divf %76, %79 : vector<8x8xf32>
    %cst_48 = arith.constant dense<0.000000e+00> : vector<8x8xf32>
    %81 = tpu.matmul %80, %70, %cst_48 {dimension_numbers = #tpu.dot_dimension_numbers<[1], [0], [0], [1], [0, 0, 1, 1], [], []>} : vector<8x8xf32>, vector<8x8xf32>, vector<8x8xf32> -> vector<8x8xf32>
    %82 = vector.extract_strided_slice %4 {offsets = [16, 0], sizes = [8, 32], strides = [1, 1]} : vector<32x32xf32> to vector<8x32xf32>
    %cst_49 = arith.constant dense<0.000000e+00> : vector<8x32xf32>
    %83 = tpu.matmul %81, %82, %cst_49 {dimension_numbers = #tpu.dot_dimension_numbers<[1], [0], [0], [1], [0, 0, 1, 1], [], []>} : vector<8x8xf32>, vector<8x32xf32>, vector<8x32xf32> -> vector<8x32xf32>
    %84 = arith.addf %67, %83 : vector<8x32xf32>
    %85 = vector.extract_strided_slice %30 {offsets = [0, 24], sizes = [8, 8], strides = [1, 1]} : vector<8x32xf32> to vector<8x8xf32>
    %86 = vector.extract_strided_slice %31 {offsets = [0, 24], sizes = [8, 8], strides = [1, 1]} : vector<8x32xf32> to vector<8x8xf32>
    %87 = vector.extract_strided_slice %32 {offsets = [0, 24], sizes = [8, 8], strides = [1, 1]} : vector<8x32xf32> to vector<8x8xf32>
    %cst_50 = arith.constant dense<0.000000e+00> : vector<8x8xf32>
    %88 = tpu.matmul %85, %86, %cst_50 {dimension_numbers = #tpu.dot_dimension_numbers<[1], [1], [0], [0], [0, 0, 1, 0], [], []>} : vector<8x8xf32>, vector<8x8xf32>, vector<8x8xf32> -> vector<8x8xf32>
    %cst_51 = arith.constant dense<0xFF800000> : vector<8xf32>
    %89 = vector.multi_reduction <maximumf>, %88, %cst_51 [1] : vector<8x8xf32> to vector<8xf32>
    %90 = vector.shape_cast %89 : vector<8xf32> to vector<8x1xf32>
    %91 = vector.broadcast %90 : vector<8x1xf32> to vector<8x8xf32>
    %92 = arith.subf %88, %91 : vector<8x8xf32>
    %93 = math.exp %92 : vector<8x8xf32>
    %cst_52 = arith.constant dense<0.000000e+00> : vector<8xf32>
    %94 = vector.multi_reduction <add>, %93, %cst_52 [1] : vector<8x8xf32> to vector<8xf32>
    %95 = vector.shape_cast %94 : vector<8xf32> to vector<8x1xf32>
    %96 = vector.broadcast %95 : vector<8x1xf32> to vector<8x8xf32>
    %97 = arith.divf %93, %96 : vector<8x8xf32>
    %cst_53 = arith.constant dense<0.000000e+00> : vector<8x8xf32>
    %98 = tpu.matmul %97, %87, %cst_53 {dimension_numbers = #tpu.dot_dimension_numbers<[1], [0], [0], [1], [0, 0, 1, 1], [], []>} : vector<8x8xf32>, vector<8x8xf32>, vector<8x8xf32> -> vector<8x8xf32>
    %99 = vector.extract_strided_slice %4 {offsets = [24, 0], sizes = [8, 32], strides = [1, 1]} : vector<32x32xf32> to vector<8x32xf32>
    %cst_54 = arith.constant dense<0.000000e+00> : vector<8x32xf32>
    %100 = tpu.matmul %98, %99, %cst_54 {dimension_numbers = #tpu.dot_dimension_numbers<[1], [0], [0], [1], [0, 0, 1, 1], [], []>} : vector<8x8xf32>, vector<8x32xf32>, vector<8x32xf32> -> vector<8x32xf32>
    %101 = arith.addf %84, %100 : vector<8x32xf32>
    %102 = vector.broadcast %5 : vector<1x32xf32> to vector<8x32xf32>
    %103 = arith.addf %101, %102 : vector<8x32xf32>
    %104 = vector.broadcast %25 : vector<8x1xf32> to vector<8x32xf32>
    %105 = arith.mulf %27, %104 : vector<8x32xf32>
    %cst_55 = arith.constant dense<0.000000e+00> : vector<32xf32>
    %106 = vector.multi_reduction <add>, %105, %cst_55 [0] : vector<8x32xf32> to vector<32xf32>
    %107 = vector.shape_cast %106 : vector<32xf32> to vector<1x32xf32>
    %cst_56 = arith.constant dense<0.000000e+00> : vector<1x32xf32>
    %108 = tpu.matmul %107, %3, %cst_56 {dimension_numbers = #tpu.dot_dimension_numbers<[1], [0], [0], [1], [0, 0, 1, 1], [], []>} : vector<1x32xf32>, vector<32x32xf32>, vector<1x32xf32> -> vector<1x32xf32>
    %cst_57 = arith.constant dense<0.000000e+00> : vector<1x32xf32>
    %109 = tpu.matmul %108, %4, %cst_57 {dimension_numbers = #tpu.dot_dimension_numbers<[1], [0], [0], [1], [0, 0, 1, 1], [], []>} : vector<1x32xf32>, vector<32x32xf32>, vector<1x32xf32> -> vector<1x32xf32>
    %110 = vector.broadcast %21 : vector<8x1xf32> to vector<8x32xf32>
    %111 = vector.broadcast %109 : vector<1x32xf32> to vector<8x32xf32>
    %112 = arith.mulf %110, %111 : vector<8x32xf32>
    %113 = arith.addf %103, %112 : vector<8x32xf32>
    %114 = arith.addf %27, %113 : vector<8x32xf32>
    %cst_58 = arith.constant dense<0.000000e+00> : vector<32xf32>
    %115 = vector.multi_reduction <add>, %114, %cst_58 [0] : vector<8x32xf32> to vector<32xf32>
    %116 = vector.shape_cast %115 : vector<32xf32> to vector<1x32xf32>
    %cst_59 = arith.constant 8.000000e+00 : f32
    %117 = vector.broadcast %cst_59 : f32 to vector<1x32xf32>
    %118 = arith.divf %116, %117 : vector<1x32xf32>
    %119 = vector.broadcast %118 : vector<1x32xf32> to vector<8x32xf32>
    %120 = arith.subf %114, %119 : vector<8x32xf32>
    %121 = arith.mulf %120, %120 : vector<8x32xf32>
    %cst_60 = arith.constant dense<0.000000e+00> : vector<32xf32>
    %122 = vector.multi_reduction <add>, %121, %cst_60 [0] : vector<8x32xf32> to vector<32xf32>
    %123 = vector.shape_cast %122 : vector<32xf32> to vector<1x32xf32>
    %cst_61 = arith.constant 8.000000e+00 : f32
    %124 = vector.broadcast %cst_61 : f32 to vector<1x32xf32>
    %125 = arith.divf %123, %124 : vector<1x32xf32>
    %cst_62 = arith.constant 9.99999974E-6 : f32
    %126 = vector.broadcast %cst_62 : f32 to vector<1x32xf32>
    %127 = arith.addf %125, %126 : vector<1x32xf32>
    %128 = math.rsqrt %127 : vector<1x32xf32>
    %129 = vector.broadcast %128 : vector<1x32xf32> to vector<8x32xf32>
    %130 = arith.mulf %120, %129 : vector<8x32xf32>
    %131 = vector.broadcast %6 : vector<1x32xf32> to vector<8x32xf32>
    %132 = arith.mulf %130, %131 : vector<8x32xf32>
    %133 = vector.broadcast %7 : vector<1x32xf32> to vector<8x32xf32>
    %134 = arith.addf %132, %133 : vector<8x32xf32>
    %cst_63 = arith.constant dense<0.000000e+00> : vector<8x64xf32>
    %135 = tpu.matmul %134, %8, %cst_63 {dimension_numbers = #tpu.dot_dimension_numbers<[1], [0], [0], [1], [0, 0, 1, 1], [], []>} : vector<8x32xf32>, vector<32x64xf32>, vector<8x64xf32> -> vector<8x64xf32>
    %136 = vector.broadcast %9 : vector<1x64xf32> to vector<8x64xf32>
    %137 = arith.addf %135, %136 : vector<8x64xf32>
    %cst_64 = arith.constant 5.000000e-01 : f32
    %138 = vector.broadcast %cst_64 : f32 to vector<8x64xf32>
    %139 = arith.mulf %138, %137 : vector<8x64xf32>
    %cst_65 = arith.constant 4.471500e-02 : f32
    %140 = vector.broadcast %cst_65 : f32 to vector<8x64xf32>
    %141 = arith.mulf %140, %137 : vector<8x64xf32>
    %142 = arith.mulf %141, %137 : vector<8x64xf32>
    %143 = arith.mulf %142, %137 : vector<8x64xf32>
    %144 = arith.addf %137, %143 : vector<8x64xf32>
    %cst_66 = arith.constant 0.797884583 : f32
    %145 = vector.broadcast %cst_66 : f32 to vector<8x64xf32>
    %146 = arith.mulf %145, %144 : vector<8x64xf32>
    %147 = math.tanh %146 : vector<8x64xf32>
    %cst_67 = arith.constant 1.000000e+00 : f32
    %148 = vector.broadcast %cst_67 : f32 to vector<8x64xf32>
    %149 = arith.addf %148, %147 : vector<8x64xf32>
    %150 = arith.mulf %139, %149 : vector<8x64xf32>
    %cst_68 = arith.constant dense<0.000000e+00> : vector<8x32xf32>
    %151 = tpu.matmul %150, %10, %cst_68 {dimension_numbers = #tpu.dot_dimension_numbers<[1], [0], [0], [1], [0, 0, 1, 1], [], []>} : vector<8x64xf32>, vector<64x32xf32>, vector<8x32xf32> -> vector<8x32xf32>
    %152 = vector.broadcast %11 : vector<1x32xf32> to vector<8x32xf32>
    %153 = arith.addf %151, %152 : vector<8x32xf32>
    %154 = arith.addf %134, %153 : vector<8x32xf32>
    %cst_69 = arith.constant dense<0.000000e+00> : vector<32xf32>
    %155 = vector.multi_reduction <add>, %154, %cst_69 [0] : vector<8x32xf32> to vector<32xf32>
    %156 = vector.shape_cast %155 : vector<32xf32> to vector<1x32xf32>
    %cst_70 = arith.constant 8.000000e+00 : f32
    %157 = vector.broadcast %cst_70 : f32 to vector<1x32xf32>
    %158 = arith.divf %156, %157 : vector<1x32xf32>
    %159 = vector.broadcast %158 : vector<1x32xf32> to vector<8x32xf32>
    %160 = arith.subf %154, %159 : vector<8x32xf32>
    %161 = arith.mulf %160, %160 : vector<8x32xf32>
    %cst_71 = arith.constant dense<0.000000e+00> : vector<32xf32>
    %162 = vector.multi_reduction <add>, %161, %cst_71 [0] : vector<8x32xf32> to vector<32xf32>
    %163 = vector.shape_cast %162 : vector<32xf32> to vector<1x32xf32>
    %cst_72 = arith.constant 8.000000e+00 : f32
    %164 = vector.broadcast %cst_72 : f32 to vector<1x32xf32>
    %165 = arith.divf %163, %164 : vector<1x32xf32>
    %cst_73 = arith.constant 9.99999974E-6 : f32
    %166 = vector.broadcast %cst_73 : f32 to vector<1x32xf32>
    %167 = arith.addf %165, %166 : vector<1x32xf32>
    %168 = math.rsqrt %167 : vector<1x32xf32>
    %169 = vector.broadcast %168 : vector<1x32xf32> to vector<8x32xf32>
    %170 = arith.mulf %160, %169 : vector<8x32xf32>
    %171 = vector.broadcast %12 : vector<1x32xf32> to vector<8x32xf32>
    %172 = arith.mulf %170, %171 : vector<8x32xf32>
    %173 = vector.broadcast %13 : vector<1x32xf32> to vector<8x32xf32>
    %174 = arith.addf %172, %173 : vector<8x32xf32>
    %c0_74 = arith.constant 0 : index
    %c0_75 = arith.constant 0 : index
    %c0_76 = arith.constant 0 : index
    %175 = vector.load %arg16[%c0_74, %c0_75, %c0_76] : memref<1x8x32xf32, #tpu.memory_space<vmem>>, vector<1x8x32xf32>
    %176 = vector.shape_cast %175 : vector<1x8x32xf32> to vector<8x32xf32>
    %177 = vector.shape_cast %174 : vector<8x32xf32> to vector<1x8x32xf32>
    tpu.vector_store %arg16[%c0_74, %c0_75, %c0_76], %177 {strides = array<i32>} : memref<1x8x32xf32, #tpu.memory_space<vmem>>, vector<1x8x32xf32>,
    return
  }
  func.func @transform_0(%arg0: i32) -> (i32, i32, i32) {
    %c0_i32 = arith.constant 0 : i32
    %c0_i32_0 = arith.constant 0 : i32
    %c0_i32_1 = arith.constant 0 : i32
    return %arg0, %c0_i32, %c0_i32_0 : i32, i32, i32
  }
  func.func @transform_1(%arg0: i32) -> (i32, i32) {
    %c0_i32 = arith.constant 0 : i32
    %c0_i32_0 = arith.constant 0 : i32
    %c0_i32_1 = arith.constant 0 : i32
    return %c0_i32, %c0_i32_0 : i32, i32
  }
  func.func @transform_2(%arg0: i32) -> (i32, i32) {
    %c0_i32 = arith.constant 0 : i32
    %c0_i32_0 = arith.constant 0 : i32
    %c0_i32_1 = arith.constant 0 : i32
    return %c0_i32, %c0_i32_0 : i32, i32
  }
  func.func @transform_3(%arg0: i32) -> (i32, i32) {
    %c0_i32 = arith.constant 0 : i32
    %c0_i32_0 = arith.constant 0 : i32
    %c0_i32_1 = arith.constant 0 : i32
    return %c0_i32, %c0_i32_0 : i32, i32
  }
  func.func @transform_4(%arg0: i32) -> (i32, i32) {
    %c0_i32 = arith.constant 0 : i32
    %c0_i32_0 = arith.constant 0 : i32
    %c0_i32_1 = arith.constant 0 : i32
    return %c0_i32, %c0_i32_0 : i32, i32
  }
  func.func @transform_5(%arg0: i32) -> (i32, i32) {
    %c0_i32 = arith.constant 0 : i32
    %c0_i32_0 = arith.constant 0 : i32
    %c0_i32_1 = arith.constant 0 : i32
    return %c0_i32, %c0_i32_0 : i32, i32
  }
  func.func @transform_6(%arg0: i32) -> (i32, i32) {
    %c0_i32 = arith.constant 0 : i32
    %c0_i32_0 = arith.constant 0 : i32
    %c0_i32_1 = arith.constant 0 : i32
    return %c0_i32, %c0_i32_0 : i32, i32
  }
  func.func @transform_7(%arg0: i32) -> (i32, i32) {
    %c0_i32 = arith.constant 0 : i32
    %c0_i32_0 = arith.constant 0 : i32
    %c0_i32_1 = arith.constant 0 : i32
    return %c0_i32, %c0_i32_0 : i32, i32
  }
  func.func @transform_8(%arg0: i32) -> (i32, i32) {
    %c0_i32 = arith.constant 0 : i32
    %c0_i32_0 = arith.constant 0 : i32
    %c0_i32_1 = arith.constant 0 : i32
    return %c0_i32, %c0_i32_0 : i32, i32
  }
  func.func @transform_9(%arg0: i32) -> (i32, i32) {
    %c0_i32 = arith.constant 0 : i32
    %c0_i32_0 = arith.constant 0 : i32
    %c0_i32_1 = arith.constant 0 : i32
    return %c0_i32, %c0_i32_0 : i32, i32
  }
  func.func @transform_10(%arg0: i32) -> (i32, i32) {
    %c0_i32 = arith.constant 0 : i32
    %c0_i32_0 = arith.constant 0 : i32
    %c0_i32_1 = arith.constant 0 : i32
    return %c0_i32, %c0_i32_0 : i32, i32
  }
  func.func @transform_11(%arg0: i32) -> (i32, i32) {
    %c0_i32 = arith.constant 0 : i32
    %c0_i32_0 = arith.constant 0 : i32
    %c0_i32_1 = arith.constant 0 : i32
    return %c0_i32, %c0_i32_0 : i32, i32
  }
  func.func @transform_12(%arg0: i32) -> (i32, i32) {
    %c0_i32 = arith.constant 0 : i32
    %c0_i32_0 = arith.constant 0 : i32
    %c0_i32_1 = arith.constant 0 : i32
    return %c0_i32, %c0_i32_0 : i32, i32
  }
  func.func @transform_13(%arg0: i32) -> (i32, i32) {
    %c0_i32 = arith.constant 0 : i32
    %c0_i32_0 = arith.constant 0 : i32
    %c0_i32_1 = arith.constant 0 : i32
    return %c0_i32, %c0_i32_0 : i32, i32
  }
  func.func @transform_14(%arg0: i32) -> (i32, i32) {
    %c0_i32 = arith.constant 0 : i32
    %c0_i32_0 = arith.constant 0 : i32
    %c0_i32_1 = arith.constant 0 : i32
    return %c0_i32, %c0_i32_0 : i32, i32
  }
  func.func @transform_15(%arg0: i32) -> (i32, i32, i32) {
    %c0_i32 = arith.constant 0 : i32
    %c0_i32_0 = arith.constant 0 : i32
    %c0_i32_1 = arith.constant 0 : i32
    return %arg0, %c0_i32, %c0_i32_0 : i32, i32, i32
  }
}

</mosaic_0001>

<llo_original>
// kernel: tpu_custom_call.1
$region0: #{tpu_custom_call.1}
  #allocation0 [shape = 'u32[]', space=smem, size = 0x4, offset = 0x4, fixed_abs, tag = 'smem constant byte address 0x4 - core index']
  #allocation1 [shape = 'u32[72,128]{1,0:T(1,128)}', space=vmem, size = 0x9000, scoped, tag = 'internal scratch']
  %s0 = inlined_call_operand.hbm [shape: f32[2,8,32], index: 0, kind: input, shape index: {}]
  %s1 = inlined_call_operand.vmem [shape: f32[32,32], index: 1, kind: input, shape index: {}]
  %s2 = inlined_call_operand.vmem [shape: f32[32,32], index: 2, kind: input, shape index: {}]
  %s3 = inlined_call_operand.vmem [shape: f32[32,32], index: 3, kind: input, shape index: {}]
  %s4 = inlined_call_operand.hbm [shape: f32[32,32], index: 4, kind: input, shape index: {}]
  %s5 = inlined_call_operand.hbm [shape: f32[32,32], index: 5, kind: input, shape index: {}]
  %s6 = inlined_call_operand.vmem [shape: f32[1,32], index: 6, kind: input, shape index: {}]
  %s7 = inlined_call_operand.vmem [shape: f32[1,32], index: 7, kind: input, shape index: {}]
  %s8 = inlined_call_operand.vmem [shape: f32[1,32], index: 8, kind: input, shape index: {}]
  %s9 = inlined_call_operand.hbm [shape: f32[32,64], index: 9, kind: input, shape index: {}]
  %s10 = inlined_call_operand.vmem [shape: f32[1,64], index: 10, kind: input, shape index: {}]
  %s11 = inlined_call_operand.vmem [shape: f32[64,32], index: 11, kind: input, shape index: {}]
  %s12 = inlined_call_operand.vmem [shape: f32[1,32], index: 12, kind: input, shape index: {}]
  %s13 = inlined_call_operand.vmem [shape: f32[1,32], index: 13, kind: input, shape index: {}]
  %s14 = inlined_call_operand.vmem [shape: f32[1,32], index: 14, kind: input, shape index: {}]
  %s15 = inlined_call_operand.hbm [shape: f32[2,8,32], index: 15, kind: output, shape index: {}]
  %s16 = sld [smem:[#allocation0]]
  $region109: #{tpu_custom_call.1} parent=0
    _
  %s18 = ssub.s32 1, %s16
  %s19 = scalar_select 0, %s18, %s16
  $region1: #{tpu_custom_call.1} parent=0
    #allocation2 [shape = 'u8[8192]{0}', space=vmem, size = 0x2000, scoped, tag = 'input window, operand 0']
    #allocation3 [shape = 's32[2]{0}', space=sflag, size = 0x8, scoped, tag = 'scoped memory for tpu_custom_call.1']
    #allocation4 [shape = 's32[2]{0}', space=sflag, size = 0x8, scoped, tag = 'scoped memory for tpu_custom_call.1']
    #allocation5 [shape = 'u8[16384]{0}', space=vmem, size = 0x4000, scoped, tag = 'input window, operand 4, single buffered']
    #allocation6 [shape = 's32[1]{0}', space=sflag, size = 0x4, scoped, tag = 'scoped memory for tpu_custom_call.1']
    #allocation7 [shape = 'u8[16384]{0}', space=vmem, size = 0x4000, scoped, tag = 'input window, operand 5, single buffered']
    #allocation8 [shape = 'u8[16384]{0}', space=vmem, size = 0x4000, scoped, tag = 'input window, operand 9, single buffered']
    #allocation9 [shape = 's32[1]{0}', space=sflag, size = 0x4, scoped, tag = 'scoped memory for tpu_custom_call.1']
    #allocation10 [shape = 'u8[8192]{0}', space=vmem, size = 0x2000, scoped, tag = 'output window, operand 0']
    %20 = vsyncpa [#allocation3], 0
    %s21 = scalar_lea.sflag [#allocation3], 1
    %22 = vsyncpa %s21, 0
    %23 = vsyncpa [#allocation6], 0
    %24 = vsyncpa [#allocation9], 0
    %25 = vsyncpa [#allocation4], 0
    %s26 = scalar_lea.sflag [#allocation4], 1
    %27 = vsyncpa %s26, 0
    loop: start=0, step=1, limit=4
    $region2: #{tpu_custom_call.1} parent=1 // loop_pre_header
      _
    $region3: #{tpu_custom_call.1} parent=1 // loop_header
      %s29 = sphi 0, %s33
      %p30 = scmp.ge.s32.totalorder %s29, 4
      %s39 = sphi 0, %s41
      %s42 = sphi 0, %s39
      %s43 = sphi 0, %s42
      %s59 = sphi 0, %s43
      %s63 = sphi 0, %s63
      %s65 = sphi 0, %s63
      %s66 = sphi 0, %s65
      %s80 = sphi 0, %s66
      %s84 = sphi 0, %s84
      %s86 = sphi 0, %s84
      %s87 = sphi 0, %s86
      %s101 = sphi 0, %s87
      %s105 = sphi 0, %s105
      %s107 = sphi 0, %s105
      %s108 = sphi 0, %s107
      %s122 = sphi 0, %s108
      %s126 = sphi 0, %s126
      %s128 = sphi 0, %s126
      %s129 = sphi 0, %s128
      %s143 = sphi 0, %s129
      %s147 = sphi 0, %s147
      %s149 = sphi 0, %s147
      %s150 = sphi 0, %s149
      %s164 = sphi 0, %s150
      %s168 = sphi 0, %s168
      %s170 = sphi 0, %s168
      %s171 = sphi 0, %s170
      %s185 = sphi 0, %s171
      %s189 = sphi 0, %s189
      %s191 = sphi 0, %s189
      %s192 = sphi 0, %s191
      %s206 = sphi 0, %s192
      %s210 = sphi 0, %s210
      %s212 = sphi 0, %s210
      %s213 = sphi 0, %s212
      %s227 = sphi 0, %s213
      %s231 = sphi 0, %s231
      %s233 = sphi 0, %s231
      %s234 = sphi 0, %s233
      %s248 = sphi 0, %s234
      %s252 = sphi 0, %s252
      %s254 = sphi 0, %s252
      %s255 = sphi 0, %s254
      %s269 = sphi 0, %s255
      %s273 = sphi 0, %s273
      %s275 = sphi 0, %s273
      %s276 = sphi 0, %s275
      %s290 = sphi 0, %s276
      %s294 = sphi 0, %s294
      %s296 = sphi 0, %s294
      %s297 = sphi 0, %s296
      %s311 = sphi 0, %s297
      %s315 = sphi 0, %s315
      %s317 = sphi 0, %s315
      %s318 = sphi 0, %s317
      %s332 = sphi 0, %s318
      %s336 = sphi 0, %s336
      %s338 = sphi 0, %s336
      %s339 = sphi 0, %s338
      %s353 = sphi 0, %s339
      %s359 = sphi 0, %s361
      %s362 = sphi 0, %s359
      %s363 = sphi 0, %s362
      %s379 = sphi 0, %s363
    $region4: #{tpu_custom_call.1} parent=1 // loop_header_branch
      %32 = sbr.rel (%p30) target = $region8
    $region5: #{tpu_custom_call.1} parent=1 // loop_body
      %s34 = ssub.s32 %s29, 1
      %s35 = ssub.s32 %s29, 2
      %s36 = sadd.s32 %s29, 1
      %s37 = ssub.s32 %s29, %s36
      %p38 = scmp.eq.s32.totalorder %s37, 0
      %s40 = sadd.s32 %s39, 1
      %s41 = scalar_select %p38, %s39, %s40
      %p44 = pneg %p38
      %p45 = scmp.eq.s32.totalorder %s29, 1
      %p46 = por %p44, %p45
      %p47 = scmp.ne.s32.totalorder %s39, %s42
      %p48 = scmp.eq.s32.totalorder %s29, 0
      %p49 = por %p47, %p48
      %p50 = scmp.ne.s32.totalorder %s39, %s42
      %p51 = scmp.eq.s32.totalorder %s34, 1
      %p52 = por %p50, %p51
      %p53 = scmp.ne.s32.totalorder %s42, %s43
      %p54 = scmp.eq.s32.totalorder %s34, 0
      %p55 = por %p53, %p54
      %p56 = scmp.ne.s32.totalorder %s42, %s43
      %p57 = scmp.eq.s32.totalorder %s35, 1
      %p58 = por %p56, %p57
      %p60 = scmp.ne.s32.totalorder %s43, %s59
      %p61 = scmp.eq.s32.totalorder %s35, 0
      %p62 = por %p60, %p61
      %s64 = sadd.s32 %s63, 1
      %p67 = scmp.eq.s32.totalorder %s29, 1
      %p68 = scmp.ne.s32.totalorder %s63, %s65
      %p69 = scmp.eq.s32.totalorder %s29, 0
      %p70 = por %p68, %p69
      %p71 = scmp.ne.s32.totalorder %s63, %s65
      %p72 = scmp.eq.s32.totalorder %s34, 1
      %p73 = por %p71, %p72
      %p74 = scmp.ne.s32.totalorder %s65, %s66
      %p75 = scmp.eq.s32.totalorder %s34, 0
      %p76 = por %p74, %p75
      %p77 = scmp.ne.s32.totalorder %s65, %s66
      %p78 = scmp.eq.s32.totalorder %s35, 1
      %p79 = por %p77, %p78
      %p81 = scmp.ne.s32.totalorder %s66, %s80
      %p82 = scmp.eq.s32.totalorder %s35, 0
      %p83 = por %p81, %p82
      %s85 = sadd.s32 %s84, 1
      %p88 = scmp.eq.s32.totalorder %s29, 1
      %p89 = scmp.ne.s32.totalorder %s84, %s86
      %p90 = scmp.eq.s32.totalorder %s29, 0
      %p91 = por %p89, %p90
      %p92 = scmp.ne.s32.totalorder %s84, %s86
      %p93 = scmp.eq.s32.totalorder %s34, 1
      %p94 = por %p92, %p93
      %p95 = scmp.ne.s32.totalorder %s86, %s87
      %p96 = scmp.eq.s32.totalorder %s34, 0
      %p97 = por %p95, %p96
      %p98 = scmp.ne.s32.totalorder %s86, %s87
      %p99 = scmp.eq.s32.totalorder %s35, 1
      %p100 = por %p98, %p99
      %p102 = scmp.ne.s32.totalorder %s87, %s101
      %p103 = scmp.eq.s32.totalorder %s35, 0
      %p104 = por %p102, %p103
      %s106 = sadd.s32 %s105, 1
      %p109 = scmp.eq.s32.totalorder %s29, 1
      %p110 = scmp.ne.s32.totalorder %s105, %s107
      %p111 = scmp.eq.s32.totalorder %s29, 0
      %p112 = por %p110, %p111
      %p113 = scmp.ne.s32.totalorder %s105, %s107
      %p114 = scmp.eq.s32.totalorder %s34, 1
      %p115 = por %p113, %p114
      %p116 = scmp.ne.s32.totalorder %s107, %s108
      %p117 = scmp.eq.s32.totalorder %s34, 0
      %p118 = por %p116, %p117
      %p119 = scmp.ne.s32.totalorder %s107, %s108
      %p120 = scmp.eq.s32.totalorder %s35, 1
      %p121 = por %p119, %p120
      %p123 = scmp.ne.s32.totalorder %s108, %s122
      %p124 = scmp.eq.s32.totalorder %s35, 0
      %p125 = por %p123, %p124
      %s127 = sadd.s32 %s126, 1
      %p130 = scmp.eq.s32.totalorder %s29, 1
      %p131 = scmp.ne.s32.totalorder %s126, %s128
      %p132 = scmp.eq.s32.totalorder %s29, 0
      %p133 = por %p131, %p132
      %p134 = scmp.ne.s32.totalorder %s126, %s128
      %p135 = scmp.eq.s32.totalorder %s34, 1
      %p136 = por %p134, %p135
      %p137 = scmp.ne.s32.totalorder %s128, %s129
      %p138 = scmp.eq.s32.totalorder %s34, 0
      %p139 = por %p137, %p138
      %p140 = scmp.ne.s32.totalorder %s128, %s129
      %p141 = scmp.eq.s32.totalorder %s35, 1
      %p142 = por %p140, %p141
      %p144 = scmp.ne.s32.totalorder %s129, %s143
      %p145 = scmp.eq.s32.totalorder %s35, 0
      %p146 = por %p144, %p145
      %s148 = sadd.s32 %s147, 1
      %p151 = scmp.eq.s32.totalorder %s29, 1
      %p152 = scmp.ne.s32.totalorder %s147, %s149
      %p153 = scmp.eq.s32.totalorder %s29, 0
      %p154 = por %p152, %p153
      %p155 = scmp.ne.s32.totalorder %s147, %s149
      %p156 = scmp.eq.s32.totalorder %s34, 1
      %p157 = por %p155, %p156
      %p158 = scmp.ne.s32.totalorder %s149, %s150
      %p159 = scmp.eq.s32.totalorder %s34, 0
      %p160 = por %p158, %p159
      %p161 = scmp.ne.s32.totalorder %s149, %s150
      %p162 = scmp.eq.s32.totalorder %s35, 1
      %p163 = por %p161, %p162
      %p165 = scmp.ne.s32.totalorder %s150, %s164
      %p166 = scmp.eq.s32.totalorder %s35, 0
      %p167 = por %p165, %p166
      %s169 = sadd.s32 %s168, 1
      %p172 = scmp.eq.s32.totalorder %s29, 1
      %p173 = scmp.ne.s32.totalorder %s168, %s170
      %p174 = scmp.eq.s32.totalorder %s29, 0
      %p175 = por %p173, %p174
      %p176 = scmp.ne.s32.totalorder %s168, %s170
      %p177 = scmp.eq.s32.totalorder %s34, 1
      %p178 = por %p176, %p177
      %p179 = scmp.ne.s32.totalorder %s170, %s171
      %p180 = scmp.eq.s32.totalorder %s34, 0
      %p181 = por %p179, %p180
      %p182 = scmp.ne.s32.totalorder %s170, %s171
      %p183 = scmp.eq.s32.totalorder %s35, 1
      %p184 = por %p182, %p183
      %p186 = scmp.ne.s32.totalorder %s171, %s185
      %p187 = scmp.eq.s32.totalorder %s35, 0
      %p188 = por %p186, %p187
      %s190 = sadd.s32 %s189, 1
      %p193 = scmp.eq.s32.totalorder %s29, 1
      %p194 = scmp.ne.s32.totalorder %s189, %s191
      %p195 = scmp.eq.s32.totalorder %s29, 0
      %p196 = por %p194, %p195
      %p197 = scmp.ne.s32.totalorder %s189, %s191
      %p198 = scmp.eq.s32.totalorder %s34, 1
      %p199 = por %p197, %p198
      %p200 = scmp.ne.s32.totalorder %s191, %s192
      %p201 = scmp.eq.s32.totalorder %s34, 0
      %p202 = por %p200, %p201
      %p203 = scmp.ne.s32.totalorder %s191, %s192
      %p204 = scmp.eq.s32.totalorder %s35, 1
      %p205 = por %p203, %p204
      %p207 = scmp.ne.s32.totalorder %s192, %s206
      %p208 = scmp.eq.s32.totalorder %s35, 0
      %p209 = por %p207, %p208
      %s211 = sadd.s32 %s210, 1
      %p214 = scmp.eq.s32.totalorder %s29, 1
      %p215 = scmp.ne.s32.totalorder %s210, %s212
      %p216 = scmp.eq.s32.totalorder %s29, 0
      %p217 = por %p215, %p216
      %p218 = scmp.ne.s32.totalorder %s210, %s212
      %p219 = scmp.eq.s32.totalorder %s34, 1
      %p220 = por %p218, %p219
      %p221 = scmp.ne.s32.totalorder %s212, %s213
      %p222 = scmp.eq.s32.totalorder %s34, 0
      %p223 = por %p221, %p222
      %p224 = scmp.ne.s32.totalorder %s212, %s213
      %p225 = scmp.eq.s32.totalorder %s35, 1
      %p226 = por %p224, %p225
      %p228 = scmp.ne.s32.totalorder %s213, %s227
      %p229 = scmp.eq.s32.totalorder %s35, 0
      %p230 = por %p228, %p229
      %s232 = sadd.s32 %s231, 1
      %p235 = scmp.eq.s32.totalorder %s29, 1
      %p236 = scmp.ne.s32.totalorder %s231, %s233
      %p237 = scmp.eq.s32.totalorder %s29, 0
      %p238 = por %p236, %p237
      %p239 = scmp.ne.s32.totalorder %s231, %s233
      %p240 = scmp.eq.s32.totalorder %s34, 1
      %p241 = por %p239, %p240
      %p242 = scmp.ne.s32.totalorder %s233, %s234
      %p243 = scmp.eq.s32.totalorder %s34, 0
      %p244 = por %p242, %p243
      %p245 = scmp.ne.s32.totalorder %s233, %s234
      %p246 = scmp.eq.s32.totalorder %s35, 1
      %p247 = por %p245, %p246
      %p249 = scmp.ne.s32.totalorder %s234, %s248
      %p250 = scmp.eq.s32.totalorder %s35, 0
      %p251 = por %p249, %p250
      %s253 = sadd.s32 %s252, 1
      %p256 = scmp.eq.s32.totalorder %s29, 1
      %p257 = scmp.ne.s32.totalorder %s252, %s254
      %p258 = scmp.eq.s32.totalorder %s29, 0
      %p259 = por %p257, %p258
      %p260 = scmp.ne.s32.totalorder %s252, %s254
      %p261 = scmp.eq.s32.totalorder %s34, 1
      %p262 = por %p260, %p261
      %p263 = scmp.ne.s32.totalorder %s254, %s255
      %p264 = scmp.eq.s32.totalorder %s34, 0
      %p265 = por %p263, %p264
      %p266 = scmp.ne.s32.totalorder %s254, %s255
      %p267 = scmp.eq.s32.totalorder %s35, 1
      %p268 = por %p266, %p267
      %p270 = scmp.ne.s32.totalorder %s255, %s269
      %p271 = scmp.eq.s32.totalorder %s35, 0
      %p272 = por %p270, %p271
      %s274 = sadd.s32 %s273, 1
      %p277 = scmp.eq.s32.totalorder %s29, 1
      %p278 = scmp.ne.s32.totalorder %s273, %s275
      %p279 = scmp.eq.s32.totalorder %s29, 0
      %p280 = por %p278, %p279
      %p281 = scmp.ne.s32.totalorder %s273, %s275
      %p282 = scmp.eq.s32.totalorder %s34, 1
      %p283 = por %p281, %p282
      %p284 = scmp.ne.s32.totalorder %s275, %s276
      %p285 = scmp.eq.s32.totalorder %s34, 0
      %p286 = por %p284, %p285
      %p287 = scmp.ne.s32.totalorder %s275, %s276
      %p288 = scmp.eq.s32.totalorder %s35, 1
      %p289 = por %p287, %p288
      %p291 = scmp.ne.s32.totalorder %s276, %s290
      %p292 = scmp.eq.s32.totalorder %s35, 0
      %p293 = por %p291, %p292
      %s295 = sadd.s32 %s294, 1
      %p298 = scmp.eq.s32.totalorder %s29, 1
      %p299 = scmp.ne.s32.totalorder %s294, %s296
      %p300 = scmp.eq.s32.totalorder %s29, 0
      %p301 = por %p299, %p300
      %p302 = scmp.ne.s32.totalorder %s294, %s296
      %p303 = scmp.eq.s32.totalorder %s34, 1
      %p304 = por %p302, %p303
      %p305 = scmp.ne.s32.totalorder %s296, %s297
      %p306 = scmp.eq.s32.totalorder %s34, 0
      %p307 = por %p305, %p306
      %p308 = scmp.ne.s32.totalorder %s296, %s297
      %p309 = scmp.eq.s32.totalorder %s35, 1
      %p310 = por %p308, %p309
      %p312 = scmp.ne.s32.totalorder %s297, %s311
      %p313 = scmp.eq.s32.totalorder %s35, 0
      %p314 = por %p312, %p313
      %s316 = sadd.s32 %s315, 1
      %p319 = scmp.eq.s32.totalorder %s29, 1
      %p320 = scmp.ne.s32.totalorder %s315, %s317
      %p321 = scmp.eq.s32.totalorder %s29, 0
      %p322 = por %p320, %p321
      %p323 = scmp.ne.s32.totalorder %s315, %s317
      %p324 = scmp.eq.s32.totalorder %s34, 1
      %p325 = por %p323, %p324
      %p326 = scmp.ne.s32.totalorder %s317, %s318
      %p327 = scmp.eq.s32.totalorder %s34, 0
      %p328 = por %p326, %p327
      %p329 = scmp.ne.s32.totalorder %s317, %s318
      %p330 = scmp.eq.s32.totalorder %s35, 1
      %p331 = por %p329, %p330
      %p333 = scmp.ne.s32.totalorder %s318, %s332
      %p334 = scmp.eq.s32.totalorder %s35, 0
      %p335 = por %p333, %p334
      %s337 = sadd.s32 %s336, 1
      %p340 = scmp.eq.s32.totalorder %s29, 1
      %p341 = scmp.ne.s32.totalorder %s336, %s338
      %p342 = scmp.eq.s32.totalorder %s29, 0
      %p343 = por %p341, %p342
      %p344 = scmp.ne.s32.totalorder %s336, %s338
      %p345 = scmp.eq.s32.totalorder %s34, 1
      %p346 = por %p344, %p345
      %p347 = scmp.ne.s32.totalorder %s338, %s339
      %p348 = scmp.eq.s32.totalorder %s34, 0
      %p349 = por %p347, %p348
      %p350 = scmp.ne.s32.totalorder %s338, %s339
      %p351 = scmp.eq.s32.totalorder %s35, 1
      %p352 = por %p350, %p351
      %p354 = scmp.ne.s32.totalorder %s339, %s353
      %p355 = scmp.eq.s32.totalorder %s35, 0
      %p356 = por %p354, %p355
      %s357 = ssub.s32 %s29, %s36
      %p358 = scmp.eq.s32.totalorder %s357, 0
      %s360 = sadd.s32 %s359, 1
      %s361 = scalar_select %p358, %s359, %s360
      %p364 = pneg %p358
      %p365 = scmp.eq.s32.totalorder %s29, 1
      %p366 = por %p364, %p365
      %p367 = scmp.ne.s32.totalorder %s359, %s362
      %p368 = scmp.eq.s32.totalorder %s29, 0
      %p369 = por %p367, %p368
      %p370 = scmp.ne.s32.totalorder %s359, %s362
      %p371 = scmp.eq.s32.totalorder %s34, 1
      %p372 = por %p370, %p371
      %p373 = scmp.ne.s32.totalorder %s362, %s363
      %p374 = scmp.eq.s32.totalorder %s34, 0
      %p375 = por %p373, %p374
      %p376 = scmp.ne.s32.totalorder %s362, %s363
      %p377 = scmp.eq.s32.totalorder %s35, 1
      %p378 = por %p376, %p377
      %p380 = scmp.ne.s32.totalorder %s363, %s379
      %p381 = scmp.eq.s32.totalorder %s35, 0
      %p382 = por %p380, %p381
      %p383 = scmp.le.s32.totalorder 1, %s29
      %p384 = scmp.lt.s32.totalorder %s29, 3
      %p385 = pnand %p383, %p384
      %p386 = pneg %p385
      // Predicated region
      $region9: #{tpu_custom_call.1} parent=5 // pred_check
        _
      $region10: #{tpu_custom_call.1} parent=5 // pred_check_branch
        %388 = sbr.rel (%p385) target = $region12
      $region11: #{tpu_custom_call.1} parent=5 // pred_region
        %s389 = ssub.s32 %s29, 1
        // Predicated region
        $region13: #{tpu_custom_call.1} parent=11 // pred_check
          %p390 = pneg %p76
        $region14: #{tpu_custom_call.1} parent=11 // pred_check_branch
          %392 = sbr.rel (%p390) target = $region16
        $region15: #{tpu_custom_call.1} parent=11 // pred_region
          _
        $region16: #{tpu_custom_call.1} parent=11 // pred_fallthru
          _
        // Predicated region
        $region17: #{tpu_custom_call.1} parent=11 // pred_check
          %p393 = pneg %p97
        $region18: #{tpu_custom_call.1} parent=11 // pred_check_branch
          %395 = sbr.rel (%p393) target = $region20
        $region19: #{tpu_custom_call.1} parent=11 // pred_region
          _
        $region20: #{tpu_custom_call.1} parent=11 // pred_fallthru
          _
        // Predicated region
        $region21: #{tpu_custom_call.1} parent=11 // pred_check
          %p396 = pneg %p118
        $region22: #{tpu_custom_call.1} parent=11 // pred_check_branch
          %398 = sbr.rel (%p396) target = $region24
        $region23: #{tpu_custom_call.1} parent=11 // pred_region
          _
        $region24: #{tpu_custom_call.1} parent=11 // pred_fallthru
          _
        // Predicated region
        $region25: #{tpu_custom_call.1} parent=11 // pred_check
          %p399 = pneg %p139
        $region26: #{tpu_custom_call.1} parent=11 // pred_check_branch
          %401 = sbr.rel (%p399) target = $region28
        $region27: #{tpu_custom_call.1} parent=11 // pred_region
          %403 = vsyncadd [#allocation6], 0
          %s404 = sshll.u32 %s4, 4
          %s405 = int_to_ptr.hbm [resolvable:$true] %s404
          %s406 = sshll.u32 [#allocation5], 4
          %s407 = int_to_ptr.vmem [resolvable:$true] %s406
          %412 = dma.hbm_to_vmem [thread:$0]  %s405, 512, %s407, [#allocation6], 128, 128, 8
        $region28: #{tpu_custom_call.1} parent=11 // pred_fallthru
          _
        // Predicated region
        $region29: #{tpu_custom_call.1} parent=11 // pred_check
          %p413 = pneg %p160
        $region30: #{tpu_custom_call.1} parent=11 // pred_check_branch
          %415 = sbr.rel (%p413) target = $region32
        $region31: #{tpu_custom_call.1} parent=11 // pred_region
          %417 = vsyncadd [#allocation6], 0
          %s418 = sshll.u32 %s5, 4
          %s419 = int_to_ptr.hbm [resolvable:$true] %s418
          %s420 = sshll.u32 [#allocation7], 4
          %s421 = int_to_ptr.vmem [resolvable:$true] %s420
          %426 = dma.hbm_to_vmem [thread:$0]  %s419, 512, %s421, [#allocation6], 128, 128, 8
        $region32: #{tpu_custom_call.1} parent=11 // pred_fallthru
          _
        // Predicated region
        $region33: #{tpu_custom_call.1} parent=11 // pred_check
          %p427 = pneg %p181
        $region34: #{tpu_custom_call.1} parent=11 // pred_check_branch
          %429 = sbr.rel (%p427) target = $region36
        $region35: #{tpu_custom_call.1} parent=11 // pred_region
          _
        $region36: #{tpu_custom_call.1} parent=11 // pred_fallthru
          _
        // Predicated region
        $region37: #{tpu_custom_call.1} parent=11 // pred_check
          %p430 = pneg %p202
        $region38: #{tpu_custom_call.1} parent=11 // pred_check_branch
          %432 = sbr.rel (%p430) target = $region40
        $region39: #{tpu_custom_call.1} parent=11 // pred_region
          _
        $region40: #{tpu_custom_call.1} parent=11 // pred_fallthru
          _
        // Predicated region
        $region41: #{tpu_custom_call.1} parent=11 // pred_check
          %p433 = pneg %p223
        $region42: #{tpu_custom_call.1} parent=11 // pred_check_branch
          %435 = sbr.rel (%p433) target = $region44
        $region43: #{tpu_custom_call.1} parent=11 // pred_region
          _
        $region44: #{tpu_custom_call.1} parent=11 // pred_fallthru
          _
        // Predicated region
        $region45: #{tpu_custom_call.1} parent=11 // pred_check
          %p436 = pneg %p244
        $region46: #{tpu_custom_call.1} parent=11 // pred_check_branch
          %438 = sbr.rel (%p436) target = $region48
        $region47: #{tpu_custom_call.1} parent=11 // pred_region
          %440 = vsyncadd [#allocation9], 0
          %s441 = sshll.u32 %s9, 4
          %s442 = int_to_ptr.hbm [resolvable:$true] %s441
          %s443 = sshll.u32 [#allocation8], 4
          %s444 = int_to_ptr.vmem [resolvable:$true] %s443
          %449 = dma.hbm_to_vmem [thread:$0]  %s442, 512, %s444, [#allocation9], 128, 128, 8
        $region48: #{tpu_custom_call.1} parent=11 // pred_fallthru
          _
        // Predicated region
        $region49: #{tpu_custom_call.1} parent=11 // pred_check
          %p450 = pneg %p265
        $region50: #{tpu_custom_call.1} parent=11 // pred_check_branch
          %452 = sbr.rel (%p450) target = $region52
        $region51: #{tpu_custom_call.1} parent=11 // pred_region
          _
        $region52: #{tpu_custom_call.1} parent=11 // pred_fallthru
          _
        // Predicated region
        $region53: #{tpu_custom_call.1} parent=11 // pred_check
          %p453 = pneg %p286
        $region54: #{tpu_custom_call.1} parent=11 // pred_check_branch
          %455 = sbr.rel (%p453) target = $region56
        $region55: #{tpu_custom_call.1} parent=11 // pred_region
          _
        $region56: #{tpu_custom_call.1} parent=11 // pred_fallthru
          _
        // Predicated region
        $region57: #{tpu_custom_call.1} parent=11 // pred_check
          %p456 = pneg %p307
        $region58: #{tpu_custom_call.1} parent=11 // pred_check_branch
          %458 = sbr.rel (%p456) target = $region60
        $region59: #{tpu_custom_call.1} parent=11 // pred_region
          _
        $region60: #{tpu_custom_call.1} parent=11 // pred_fallthru
          _
        // Predicated region
        $region61: #{tpu_custom_call.1} parent=11 // pred_check
          %p459 = pneg %p328
        $region62: #{tpu_custom_call.1} parent=11 // pred_check_branch
          %461 = sbr.rel (%p459) target = $region64
        $region63: #{tpu_custom_call.1} parent=11 // pred_region
          _
        $region64: #{tpu_custom_call.1} parent=11 // pred_fallthru
          _
        // Predicated region
        $region65: #{tpu_custom_call.1} parent=11 // pred_check
          %p462 = pneg %p349
        $region66: #{tpu_custom_call.1} parent=11 // pred_check_branch
          %464 = sbr.rel (%p462) target = $region68
        $region67: #{tpu_custom_call.1} parent=11 // pred_region
          _
        $region68: #{tpu_custom_call.1} parent=11 // pred_fallthru
          _
      $region12: #{tpu_custom_call.1} parent=5 // pred_fallthru
        _
      %p465 = scmp.lt.s32.totalorder %s29, 2
      // Predicated region
      $region69: #{tpu_custom_call.1} parent=5 // pred_check
        %p466 = pneg %p465
      $region70: #{tpu_custom_call.1} parent=5 // pred_check_branch
        %468 = sbr.rel (%p466) target = $region72
      $region71: #{tpu_custom_call.1} parent=5 // pred_region
        // Predicated region
        $region73: #{tpu_custom_call.1} parent=71 // pred_check
          %p469 = pneg %p49
        $region74: #{tpu_custom_call.1} parent=71 // pred_check_branch
          %471 = sbr.rel (%p469) target = $region76
        $region75: #{tpu_custom_call.1} parent=71 // pred_region
          %s472 = sand.u32 %s39, 1
          %s473 = scalar_lea.sflag [#allocation3], %s472
          %s474 = sand.u32 %s39, 1
          %s475 = smul.addr %s474, 8
          %s476 = scalar_lea.vmem [#allocation2], %s475
          %478 = vsyncadd %s473, 0
          %s479 = smul.addr %s29, 8
          %s480 = scalar_lea.hbm %s0, %s479
          %s482 = sshll.u32 %s480, 4
          %s483 = int_to_ptr.hbm [resolvable:$true] %s482
          %s484 = sshll.u32 %s476, 4
          %s485 = int_to_ptr.vmem [resolvable:$true] %s484
          %487 = dma.hbm_to_vmem [thread:$0]  %s483, 128, %s485, %s473
        $region76: #{tpu_custom_call.1} parent=71 // pred_fallthru
          _
      $region72: #{tpu_custom_call.1} parent=5 // pred_fallthru
        _
      %p488 = scmp.le.s32.totalorder 1, %s29
      %p489 = scmp.lt.s32.totalorder %s29, 3
      %p490 = pnand %p488, %p489
      %p491 = pneg %p490
      // Predicated region
      $region77: #{tpu_custom_call.1} parent=5 // pred_check
        _
      $region78: #{tpu_custom_call.1} parent=5 // pred_check_branch
        %493 = sbr.rel (%p490) target = $region80
      $region79: #{tpu_custom_call.1} parent=5 // pred_region
        %s494 = ssub.s32 %s29, 1
        %s495 = sand.u32 %s42, 1
        %s496 = scalar_lea.sflag [#allocation3], %s495
        %s497 = sand.u32 %s42, 1
        %s498 = smul.addr %s497, 8
        %s499 = scalar_lea.vmem [#allocation2], %s498
        // Predicated region
        $region81: #{tpu_custom_call.1} parent=79 // pred_check
          %p500 = pneg %p55
        $region82: #{tpu_custom_call.1} parent=79 // pred_check_branch
          %502 = sbr.rel (%p500) target = $region84
        $region83: #{tpu_custom_call.1} parent=79 // pred_region
          %504 = dma.done %s496, 128
        $region84: #{tpu_custom_call.1} parent=79 // pred_fallthru
          _
        // Predicated region
        $region85: #{tpu_custom_call.1} parent=79 // pred_check
          %p505 = pneg %p139
        $region86: #{tpu_custom_call.1} parent=79 // pred_check_branch
          %507 = sbr.rel (%p505) target = $region88
        $region87: #{tpu_custom_call.1} parent=79 // pred_region
          %509 = dma.done [#allocation6], 512
        $region88: #{tpu_custom_call.1} parent=79 // pred_fallthru
          _
        // Predicated region
        $region89: #{tpu_custom_call.1} parent=79 // pred_check
          %p510 = pneg %p160
        $region90: #{tpu_custom_call.1} parent=79 // pred_check_branch
          %512 = sbr.rel (%p510) target = $region92
        $region91: #{tpu_custom_call.1} parent=79 // pred_region
          %514 = dma.done [#allocation6], 512
        $region92: #{tpu_custom_call.1} parent=79 // pred_fallthru
          _
        // Predicated region
        $region93: #{tpu_custom_call.1} parent=79 // pred_check
          %p515 = pneg %p244
        $region94: #{tpu_custom_call.1} parent=79 // pred_check_branch
          %517 = sbr.rel (%p515) target = $region96
        $region95: #{tpu_custom_call.1} parent=79 // pred_region
          %519 = dma.done [#allocation9], 512
        $region96: #{tpu_custom_call.1} parent=79 // pred_fallthru
          _
        %s520 = sand.u32 %s42, 1
        %s521 = scalar_lea.sflag [#allocation3], %s520
        %s522 = sand.u32 %s42, 1
        %s523 = smul.addr %s522, 8
        %s524 = scalar_lea.vmem [#allocation2], %s523
        %p525 = pneg %p55
        %p526 = pneg %p52
        %p527 = pneg %p76
        %p528 = pneg %p73
        %p529 = pneg %p97
        %p530 = pneg %p94
        %p531 = pneg %p118
        %p532 = pneg %p115
        %p533 = pneg %p139
        %p534 = pneg %p136
        %p535 = pneg %p160
        %p536 = pneg %p157
        %p537 = pneg %p181
        %p538 = pneg %p178
        %p539 = pneg %p202
        %p540 = pneg %p199
        %p541 = pneg %p223
        %p542 = pneg %p220
        %p543 = pneg %p244
        %p544 = pneg %p241
        %p545 = pneg %p265
        %p546 = pneg %p262
        %p547 = pneg %p286
        %p548 = pneg %p283
        %p549 = pneg %p307
        %p550 = pneg %p304
        %p551 = pneg %p328
        %p552 = pneg %p325
        %p553 = pneg %p349
        %p554 = pneg %p346
        %p555 = pneg %p375
        %p556 = pneg %p372
        %s557 = sand.u32 %s362, 1
        %s558 = scalar_lea.sflag [#allocation4], %s557
        %s559 = sand.u32 %s362, 1
        %s560 = smul.addr %s559, 8
        %s561 = scalar_lea.vmem [#allocation10], %s560
        %v562 = vld [vmem:[%s1] sm:$0xff]
        %v563 = vld [vmem:[%s1 + $0x8] sm:$0xff]
        %v564 = vld [vmem:[%s1 + $0x10] sm:$0xff]
        %v565 = vld [vmem:[%s1 + $0x18] sm:$0xff]
        %v566 = vld [vmem:[%s2] sm:$0xff]
        %v567 = vld [vmem:[%s2 + $0x8] sm:$0xff]
        %v568 = vld [vmem:[%s2 + $0x10] sm:$0xff]
        %v569 = vld [vmem:[%s2 + $0x18] sm:$0xff]
        %v570 = vld [vmem:[%s3] sm:$0xff]
        %v571 = vld [vmem:[%s3 + $0x8] sm:$0xff]
        %v572 = vld [vmem:[%s3 + $0x10] sm:$0xff]
        %v573 = vld [vmem:[%s3 + $0x18] sm:$0xff]
        %v574 = vld [vmem:[#allocation5] sm:$0xff]
        %v575 = vld [vmem:[#allocation5 + $0x8] sm:$0xff]
        %v576 = vld [vmem:[#allocation5 + $0x10] sm:$0xff]
        %v577 = vld [vmem:[#allocation5 + $0x18] sm:$0xff]
        %v578 = vld [vmem:[#allocation7] sm:$0xff]
        %v579 = vld [vmem:[#allocation7 + $0x8] sm:$0xff]
        %v580 = vld [vmem:[#allocation7 + $0x10] sm:$0xff]
        %v581 = vld [vmem:[#allocation7 + $0x18] sm:$0xff]
        %v582 = vld [vmem:[%s6] sm:$0x1]
        %v583 = vld [vmem:[%s7] sm:$0x1]
        %v584 = vld [vmem:[%s8] sm:$0x1]
        %v585 = vld [vmem:[#allocation8] sm:$0xff]
        %v586 = vld [vmem:[#allocation8 + $0x8] sm:$0xff]
        %v587 = vld [vmem:[#allocation8 + $0x10] sm:$0xff]
        %v588 = vld [vmem:[#allocation8 + $0x18] sm:$0xff]
        %v589 = vld [vmem:[%s10] sm:$0x1]
        %v590 = vld [vmem:[%s11] sm:$0xff]
        %v591 = vld [vmem:[%s11 + $0x8] sm:$0xff]
        %v592 = vld [vmem:[%s11 + $0x10] sm:$0xff]
        %v593 = vld [vmem:[%s11 + $0x18] sm:$0xff]
        %v594 = vld [vmem:[%s11 + $0x20] sm:$0xff]
        %v595 = vld [vmem:[%s11 + $0x28] sm:$0xff]
        %v596 = vld [vmem:[%s11 + $0x30] sm:$0xff]
        %v597 = vld [vmem:[%s11 + $0x38] sm:$0xff]
        %v598 = vld [vmem:[%s12] sm:$0x1]
        %v599 = vld [vmem:[%s13] sm:$0x1]
        %v600 = vld [vmem:[%s14] sm:$0x1]
        %v601 = vlaneseq
        %v602 = vshrl.u32 %v601, 7
        %vm603 = vcmp.ge.s32.totalorder %v602, 0
        %vm604 = vcmp.lt.s32.totalorder %v602, 7
        %vm605 = vmand %vm603, %vm604
        %v606 = vsel %vm605, 1, 0
        %v607 = vcvt.s32.f32 %v606
        %vm608 = vcmp.eq.s32.totalorder %v602, 7
        %v609 = vsel %vm608, 1, 0
        %v610 = vcvt.s32.f32 %v609
        %v611 = vld [vmem:[%s499] sm:$0xff]
        %vm612 = vcmask 261120
        %v614 = vsel %vm612, %v611, 0
        %616 = vmatpush.msra.mxu0 0.0
        %617 = vmatpush.msra.mxu0 0.0
        %618 = vmatpush.msra.mxu0 0.0
        %619 = vmatpush.msra.mxu0 0.0
        %620 = vmatpush.msra.mxu0 0.0
        %621 = vmatpush.msra.mxu0 0.0
        %622 = vmatpush.msra.mxu0 0.0
        %623 = vmatpush.msra.mxu0 0.0
        %624 = vmatpush.msra.mxu0 0.0
        %625 = vmatpush.msra.mxu0 0.0
        %626 = vmatpush.msra.mxu0 0.0
        %627 = vmatpush.msra.mxu0 0.0
        %628 = vmatpush.msra.mxu0 %v565
        %629 = vmatpush.msra.mxu0 %v564
        %630 = vmatpush.msra.mxu0 %v563
        %631 = vmatpush.msra.mxu0 %v562
        %632 = vmatmul.f32.gmra.mxu0 %v614
        %v633 = vpop.f32.mrf.mxu0
        %v634 = vadd.f32 0.0, %v633
        %635 = vdwg.mxu0
        %v636 = vmul.f32 %v634, 0.35355338
        %637 = vmatpush.msra.mxu0 0.0
        %638 = vmatpush.msra.mxu0 0.0
        %639 = vmatpush.msra.mxu0 0.0
        %640 = vmatpush.msra.mxu0 0.0
        %641 = vmatpush.msra.mxu0 0.0
        %642 = vmatpush.msra.mxu0 0.0
        %643 = vmatpush.msra.mxu0 0.0
        %644 = vmatpush.msra.mxu0 0.0
        %645 = vmatpush.msra.mxu0 0.0
        %646 = vmatpush.msra.mxu0 0.0
        %647 = vmatpush.msra.mxu0 0.0
        %648 = vmatpush.msra.mxu0 0.0
        %649 = vmatpush.msra.mxu0 %v569
        %650 = vmatpush.msra.mxu0 %v568
        %651 = vmatpush.msra.mxu0 %v567
        %652 = vmatpush.msra.mxu0 %v566
        %653 = vmatmul.f32.gmra.mxu0 %v614
        %v654 = vpop.f32.mrf.mxu0
        %v655 = vadd.f32 0.0, %v654
        %656 = vdwg.mxu0
        %657 = vmatpush.msra.mxu0 0.0
        %658 = vmatpush.msra.mxu0 0.0
        %659 = vmatpush.msra.mxu0 0.0
        %660 = vmatpush.msra.mxu0 0.0
        %661 = vmatpush.msra.mxu0 0.0
        %662 = vmatpush.msra.mxu0 0.0
        %663 = vmatpush.msra.mxu0 0.0
        %664 = vmatpush.msra.mxu0 0.0
        %665 = vmatpush.msra.mxu0 0.0
        %666 = vmatpush.msra.mxu0 0.0
        %667 = vmatpush.msra.mxu0 0.0
        %668 = vmatpush.msra.mxu0 0.0
        %669 = vmatpush.msra.mxu0 %v573
        %670 = vmatpush.msra.mxu0 %v572
        %671 = vmatpush.msra.mxu0 %v571
        %672 = vmatpush.msra.mxu0 %v570
        %673 = vmatmul.f32.gmra.mxu0 %v614
        %v674 = vpop.f32.mrf.mxu0
        %v675 = vadd.f32 0.0, %v674
        %676 = vdwg.mxu0
        %vm677 = vcmask 64512
        %v679 = vsel %vm677, %v636, 0
        %v682 = vsel %vm677, %v655, 0
        %684 = vmatpush.xpose.msra.mxu0 0.0
        %685 = vmatpush.xpose.msra.mxu0 0.0
        %686 = vmatpush.xpose.msra.mxu0 0.0
        %687 = vmatpush.xpose.msra.mxu0 0.0
        %688 = vmatpush.xpose.msra.mxu0 0.0
        %689 = vmatpush.xpose.msra.mxu0 0.0
        %690 = vmatpush.xpose.msra.mxu0 0.0
        %691 = vmatpush.xpose.msra.mxu0 0.0
        %692 = vmatpush.xpose.msra.mxu0 0.0
        %693 = vmatpush.xpose.msra.mxu0 0.0
        %694 = vmatpush.xpose.msra.mxu0 0.0
        %695 = vmatpush.xpose.msra.mxu0 0.0
        %696 = vmatpush.xpose.msra.mxu0 0.0
        %697 = vmatpush.xpose.msra.mxu0 0.0
        %698 = vmatpush.xpose.msra.mxu0 0.0
        %699 = vmatpush.xpose.msra.mxu0 %v682
        %700 = vmatmul.f32.gmra.mxu0 %v679
        %v701 = vpop.f32.mrf.mxu0
        %v702 = vadd.f32 0.0, %v701
        %703 = vdwg.mxu0
        %v704 = vsel %vm677, %v702, -inf
        %705 = vmax.xlane.f32.xlu0 %v704
        %v706 = vpop.xlane.xlu0 %705
        %v707 = vsub.f32 %v702, %v706
        %v708 = vmul.f32 %v707, 1.442695
        %v709 = vpow.pop %v708
        %v710 = vsel %vm677, %v709, 0.0
        %711 = vadd.xlane.f32.xlu0 %v710
        %v712 = vpop.xlane.xlu0 %711
        %v713 = vrcp.pop %v712
        %v714 = vmul.f32 %v712, %v713
        %v715 = vsub.f32 1.0, %v714
        %v716 = vmul.f32 %v713, %v715
        %v717 = vadd.f32 %v713, %v716
        %vm718 = vweird.f32 %v712
        %vm719 = vweird.f32 %v713
        %vm720 = vmor %vm718, %vm719
        %v721 = vsel %vm720, %v713, %v717
        %v722 = vand.u32 2147483647, %v712
        %vm723 = vcmp.eq.f32.partialorder %v722, 8.507059e+37
        %v724 = vand.u32 %v712, 2147483648
        %v725 = vor.u32 1.1754944e-38, %v724
        %v726 = vsel %vm723, %v725, %v721
        %v727 = vmul.f32 %v709, %v726
        %v729 = vsel %vm677, %v727, 0
        %731 = vmatpush.msra.mxu0 0.0
        %732 = vmatpush.msra.mxu0 0.0
        %733 = vmatpush.msra.mxu0 0.0
        %734 = vmatpush.msra.mxu0 0.0
        %735 = vmatpush.msra.mxu0 0.0
        %736 = vmatpush.msra.mxu0 0.0
        %737 = vmatpush.msra.mxu0 0.0
        %738 = vmatpush.msra.mxu0 0.0
        %739 = vmatpush.msra.mxu0 0.0
        %740 = vmatpush.msra.mxu0 0.0
        %741 = vmatpush.msra.mxu0 0.0
        %742 = vmatpush.msra.mxu0 0.0
        %743 = vmatpush.msra.mxu0 0.0
        %744 = vmatpush.msra.mxu0 0.0
        %745 = vmatpush.msra.mxu0 0.0
        %746 = vmatpush.msra.mxu0 %v675
        %747 = vmatmul.f32.gmra.mxu0 %v729
        %v748 = vpop.f32.mrf.mxu0
        %v749 = vadd.f32 0.0, %v748
        %750 = vdwg.mxu0
        %751 = vrot.lane.b32.xlu0 %v636, 120
        %v752 = vpop.permute.xlu0 %751
        %753 = vrot.lane.b32.xlu0 %v655, 120
        %v754 = vpop.permute.xlu0 %753
        %v755 = vsel %vm677, %v752, 0
        %v757 = vsel %vm677, %v754, 0
        %759 = vmatpush.xpose.msra.mxu0 0.0
        %760 = vmatpush.xpose.msra.mxu0 0.0
        %761 = vmatpush.xpose.msra.mxu0 0.0
        %762 = vmatpush.xpose.msra.mxu0 0.0
        %763 = vmatpush.xpose.msra.mxu0 0.0
        %764 = vmatpush.xpose.msra.mxu0 0.0
        %765 = vmatpush.xpose.msra.mxu0 0.0
        %766 = vmatpush.xpose.msra.mxu0 0.0
        %767 = vmatpush.xpose.msra.mxu0 0.0
        %768 = vmatpush.xpose.msra.mxu0 0.0
        %769 = vmatpush.xpose.msra.mxu0 0.0
        %770 = vmatpush.xpose.msra.mxu0 0.0
        %771 = vmatpush.xpose.msra.mxu0 0.0
        %772 = vmatpush.xpose.msra.mxu0 0.0
        %773 = vmatpush.xpose.msra.mxu0 0.0
        %774 = vmatpush.xpose.msra.mxu0 %v757
        %775 = vmatmul.f32.gmra.mxu0 %v755
        %v776 = vpop.f32.mrf.mxu0
        %v777 = vadd.f32 0.0, %v776
        %778 = vdwg.mxu0
        %v779 = vsel %vm677, %v777, -inf
        %780 = vmax.xlane.f32.xlu0 %v779
        %v781 = vpop.xlane.xlu0 %780
        %v782 = vsub.f32 %v777, %v781
        %v783 = vmul.f32 %v782, 1.442695
        %v784 = vpow.pop %v783
        %v785 = vsel %vm677, %v784, 0.0
        %786 = vadd.xlane.f32.xlu0 %v785
        %v787 = vpop.xlane.xlu0 %786
        %v788 = vrcp.pop %v787
        %v789 = vmul.f32 %v787, %v788
        %v790 = vsub.f32 1.0, %v789
        %v791 = vmul.f32 %v788, %v790
        %v792 = vadd.f32 %v788, %v791
        %vm793 = vweird.f32 %v787
        %vm794 = vweird.f32 %v788
        %vm795 = vmor %vm793, %vm794
        %v796 = vsel %vm795, %v788, %v792
        %v797 = vand.u32 2147483647, %v787
        %vm798 = vcmp.eq.f32.partialorder %v797, 8.507059e+37
        %v799 = vand.u32 %v787, 2147483648
        %v800 = vor.u32 1.1754944e-38, %v799
        %v801 = vsel %vm798, %v800, %v796
        %v802 = vmul.f32 %v784, %v801
        %804 = vrot.lane.b32.xlu0 %v675, 120
        %v805 = vpop.permute.xlu0 %804
        %v808 = vsel %vm677, %v802, 0
        %810 = vmatpush.msra.mxu0 0.0
        %811 = vmatpush.msra.mxu0 0.0
        %812 = vmatpush.msra.mxu0 0.0
        %813 = vmatpush.msra.mxu0 0.0
        %814 = vmatpush.msra.mxu0 0.0
        %815 = vmatpush.msra.mxu0 0.0
        %816 = vmatpush.msra.mxu0 0.0
        %817 = vmatpush.msra.mxu0 0.0
        %818 = vmatpush.msra.mxu0 0.0
        %819 = vmatpush.msra.mxu0 0.0
        %820 = vmatpush.msra.mxu0 0.0
        %821 = vmatpush.msra.mxu0 0.0
        %822 = vmatpush.msra.mxu0 0.0
        %823 = vmatpush.msra.mxu0 0.0
        %824 = vmatpush.msra.mxu0 0.0
        %825 = vmatpush.msra.mxu0 %v805
        %826 = vmatmul.f32.gmra.mxu0 %v808
        %v827 = vpop.f32.mrf.mxu0
        %v828 = vadd.f32 0.0, %v827
        %829 = vdwg.mxu0
        %v831 = vsel %vm677, %v828, 0
        %833 = vmatpush.msra.mxu0 0.0
        %834 = vmatpush.msra.mxu0 0.0
        %835 = vmatpush.msra.mxu0 0.0
        %836 = vmatpush.msra.mxu0 0.0
        %837 = vmatpush.msra.mxu0 0.0
        %838 = vmatpush.msra.mxu0 0.0
        %839 = vmatpush.msra.mxu0 0.0
        %840 = vmatpush.msra.mxu0 0.0
        %841 = vmatpush.msra.mxu0 0.0
        %842 = vmatpush.msra.mxu0 0.0
        %843 = vmatpush.msra.mxu0 0.0
        %844 = vmatpush.msra.mxu0 0.0
        %845 = vmatpush.msra.mxu0 0.0
        %846 = vmatpush.msra.mxu0 0.0
        %847 = vmatpush.msra.mxu0 0.0
        %848 = vmatpush.msra.mxu0 %v579
        %849 = vmatmul.f32.gmra.mxu0 %v831
        %v850 = vpop.f32.mrf.mxu0
        %v851 = vadd.f32 0.0, %v850
        %852 = vdwg.mxu0
        %v854 = vsel %vm677, %v749, 0
        %856 = vmatpush.msra.mxu0 0.0
        %857 = vmatpush.msra.mxu0 0.0
        %858 = vmatpush.msra.mxu0 0.0
        %859 = vmatpush.msra.mxu0 0.0
        %860 = vmatpush.msra.mxu0 0.0
        %861 = vmatpush.msra.mxu0 0.0
        %862 = vmatpush.msra.mxu0 0.0
        %863 = vmatpush.msra.mxu0 0.0
        %864 = vmatpush.msra.mxu0 0.0
        %865 = vmatpush.msra.mxu0 0.0
        %866 = vmatpush.msra.mxu0 0.0
        %867 = vmatpush.msra.mxu0 0.0
        %868 = vmatpush.msra.mxu0 0.0
        %869 = vmatpush.msra.mxu0 0.0
        %870 = vmatpush.msra.mxu0 0.0
        %871 = vmatpush.msra.mxu0 %v578
        %872 = vmatmul.f32.gmra.mxu0 %v854
        %v873 = vpop.f32.mrf.mxu0
        %v874 = vadd.f32 %v851, %v873
        %875 = vdwg.mxu0
        %876 = vrot.lane.b32.xlu0 %v636, 112
        %v877 = vpop.permute.xlu0 %876
        %878 = vrot.lane.b32.xlu0 %v655, 112
        %v879 = vpop.permute.xlu0 %878
        %v880 = vsel %vm677, %v877, 0
        %v882 = vsel %vm677, %v879, 0
        %884 = vmatpush.xpose.msra.mxu0 0.0
        %885 = vmatpush.xpose.msra.mxu0 0.0
        %886 = vmatpush.xpose.msra.mxu0 0.0
        %887 = vmatpush.xpose.msra.mxu0 0.0
        %888 = vmatpush.xpose.msra.mxu0 0.0
        %889 = vmatpush.xpose.msra.mxu0 0.0
        %890 = vmatpush.xpose.msra.mxu0 0.0
        %891 = vmatpush.xpose.msra.mxu0 0.0
        %892 = vmatpush.xpose.msra.mxu0 0.0
        %893 = vmatpush.xpose.msra.mxu0 0.0
        %894 = vmatpush.xpose.msra.mxu0 0.0
        %895 = vmatpush.xpose.msra.mxu0 0.0
        %896 = vmatpush.xpose.msra.mxu0 0.0
        %897 = vmatpush.xpose.msra.mxu0 0.0
        %898 = vmatpush.xpose.msra.mxu0 0.0
        %899 = vmatpush.xpose.msra.mxu0 %v882
        %900 = vmatmul.f32.gmra.mxu0 %v880
        %v901 = vpop.f32.mrf.mxu0
        %v902 = vadd.f32 0.0, %v901
        %903 = vdwg.mxu0
        %v904 = vsel %vm677, %v902, -inf
        %905 = vmax.xlane.f32.xlu0 %v904
        %v906 = vpop.xlane.xlu0 %905
        %v907 = vsub.f32 %v902, %v906
        %v908 = vmul.f32 %v907, 1.442695
        %v909 = vpow.pop %v908
        %v910 = vsel %vm677, %v909, 0.0
        %911 = vadd.xlane.f32.xlu0 %v910
        %v912 = vpop.xlane.xlu0 %911
        %v913 = vrcp.pop %v912
        %v914 = vmul.f32 %v912, %v913
        %v915 = vsub.f32 1.0, %v914
        %v916 = vmul.f32 %v913, %v915
        %v917 = vadd.f32 %v913, %v916
        %vm918 = vweird.f32 %v912
        %vm919 = vweird.f32 %v913
        %vm920 = vmor %vm918, %vm919
        %v921 = vsel %vm920, %v913, %v917
        %v922 = vand.u32 2147483647, %v912
        %vm923 = vcmp.eq.f32.partialorder %v922, 8.507059e+37
        %v924 = vand.u32 %v912, 2147483648
        %v925 = vor.u32 1.1754944e-38, %v924
        %v926 = vsel %vm923, %v925, %v921
        %v927 = vmul.f32 %v909, %v926
        %928 = vrot.lane.b32.xlu0 %v675, 112
        %v929 = vpop.permute.xlu0 %928
        %v932 = vsel %vm677, %v927, 0
        %934 = vmatpush.msra.mxu0 0.0
        %935 = vmatpush.msra.mxu0 0.0
        %936 = vmatpush.msra.mxu0 0.0
        %937 = vmatpush.msra.mxu0 0.0
        %938 = vmatpush.msra.mxu0 0.0
        %939 = vmatpush.msra.mxu0 0.0
        %940 = vmatpush.msra.mxu0 0.0
        %941 = vmatpush.msra.mxu0 0.0
        %942 = vmatpush.msra.mxu0 0.0
        %943 = vmatpush.msra.mxu0 0.0
        %944 = vmatpush.msra.mxu0 0.0
        %945 = vmatpush.msra.mxu0 0.0
        %946 = vmatpush.msra.mxu0 0.0
        %947 = vmatpush.msra.mxu0 0.0
        %948 = vmatpush.msra.mxu0 0.0
        %949 = vmatpush.msra.mxu0 %v929
        %950 = vmatmul.f32.gmra.mxu0 %v932
        %v951 = vpop.f32.mrf.mxu0
        %v952 = vadd.f32 0.0, %v951
        %953 = vdwg.mxu0
        %v955 = vsel %vm677, %v952, 0
        %957 = vmatpush.msra.mxu0 0.0
        %958 = vmatpush.msra.mxu0 0.0
        %959 = vmatpush.msra.mxu0 0.0
        %960 = vmatpush.msra.mxu0 0.0
        %961 = vmatpush.msra.mxu0 0.0
        %962 = vmatpush.msra.mxu0 0.0
        %963 = vmatpush.msra.mxu0 0.0
        %964 = vmatpush.msra.mxu0 0.0
        %965 = vmatpush.msra.mxu0 0.0
        %966 = vmatpush.msra.mxu0 0.0
        %967 = vmatpush.msra.mxu0 0.0
        %968 = vmatpush.msra.mxu0 0.0
        %969 = vmatpush.msra.mxu0 0.0
        %970 = vmatpush.msra.mxu0 0.0
        %971 = vmatpush.msra.mxu0 0.0
        %972 = vmatpush.msra.mxu0 %v580
        %973 = vmatmul.f32.gmra.mxu0 %v955
        %v974 = vpop.f32.mrf.mxu0
        %v975 = vadd.f32 0.0, %v974
        %976 = vdwg.mxu0
        %v977 = vadd.f32 %v874, %v975
        %978 = vrot.lane.b32.xlu0 %v636, 104
        %v979 = vpop.permute.xlu0 %978
        %980 = vrot.lane.b32.xlu0 %v655, 104
        %v981 = vpop.permute.xlu0 %980
        %v982 = vsel %vm677, %v979, 0
        %v984 = vsel %vm677, %v981, 0
        %986 = vmatpush.xpose.msra.mxu0 0.0
        %987 = vmatpush.xpose.msra.mxu0 0.0
        %988 = vmatpush.xpose.msra.mxu0 0.0
        %989 = vmatpush.xpose.msra.mxu0 0.0
        %990 = vmatpush.xpose.msra.mxu0 0.0
        %991 = vmatpush.xpose.msra.mxu0 0.0
        %992 = vmatpush.xpose.msra.mxu0 0.0
        %993 = vmatpush.xpose.msra.mxu0 0.0
        %994 = vmatpush.xpose.msra.mxu0 0.0
        %995 = vmatpush.xpose.msra.mxu0 0.0
        %996 = vmatpush.xpose.msra.mxu0 0.0
        %997 = vmatpush.xpose.msra.mxu0 0.0
        %998 = vmatpush.xpose.msra.mxu0 0.0
        %999 = vmatpush.xpose.msra.mxu0 0.0
        %1000 = vmatpush.xpose.msra.mxu0 0.0
        %1001 = vmatpush.xpose.msra.mxu0 %v984
        %1002 = vmatmul.f32.gmra.mxu0 %v982
        %v1003 = vpop.f32.mrf.mxu0
        %v1004 = vadd.f32 0.0, %v1003
        %1005 = vdwg.mxu0
        %v1006 = vsel %vm677, %v1004, -inf
        %1007 = vmax.xlane.f32.xlu0 %v1006
        %v1008 = vpop.xlane.xlu0 %1007
        %v1009 = vsub.f32 %v1004, %v1008
        %v1010 = vmul.f32 %v1009, 1.442695
        %v1011 = vpow.pop %v1010
        %v1012 = vsel %vm677, %v1011, 0.0
        %1013 = vadd.xlane.f32.xlu0 %v1012
        %v1014 = vpop.xlane.xlu0 %1013
        %v1015 = vrcp.pop %v1014
        %v1016 = vmul.f32 %v1014, %v1015
        %v1017 = vsub.f32 1.0, %v1016
        %v1018 = vmul.f32 %v1015, %v1017
        %v1019 = vadd.f32 %v1015, %v1018
        %vm1020 = vweird.f32 %v1014
        %vm1021 = vweird.f32 %v1015
        %vm1022 = vmor %vm1020, %vm1021
        %v1023 = vsel %vm1022, %v1015, %v1019
        %v1024 = vand.u32 2147483647, %v1014
        %vm1025 = vcmp.eq.f32.partialorder %v1024, 8.507059e+37
        %v1026 = vand.u32 %v1014, 2147483648
        %v1027 = vor.u32 1.1754944e-38, %v1026
        %v1028 = vsel %vm1025, %v1027, %v1023
        %v1029 = vmul.f32 %v1011, %v1028
        %1030 = vrot.lane.b32.xlu0 %v675, 104
        %v1031 = vpop.permute.xlu0 %1030
        %v1034 = vsel %vm677, %v1029, 0
        %1036 = vmatpush.msra.mxu0 0.0
        %1037 = vmatpush.msra.mxu0 0.0
        %1038 = vmatpush.msra.mxu0 0.0
        %1039 = vmatpush.msra.mxu0 0.0
        %1040 = vmatpush.msra.mxu0 0.0
        %1041 = vmatpush.msra.mxu0 0.0
        %1042 = vmatpush.msra.mxu0 0.0
        %1043 = vmatpush.msra.mxu0 0.0
        %1044 = vmatpush.msra.mxu0 0.0
        %1045 = vmatpush.msra.mxu0 0.0
        %1046 = vmatpush.msra.mxu0 0.0
        %1047 = vmatpush.msra.mxu0 0.0
        %1048 = vmatpush.msra.mxu0 0.0
        %1049 = vmatpush.msra.mxu0 0.0
        %1050 = vmatpush.msra.mxu0 0.0
        %1051 = vmatpush.msra.mxu0 %v1031
        %1052 = vmatmul.f32.gmra.mxu0 %v1034
        %v1053 = vpop.f32.mrf.mxu0
        %v1054 = vadd.f32 0.0, %v1053
        %1055 = vdwg.mxu0
        %v1057 = vsel %vm677, %v1054, 0
        %1059 = vmatpush.msra.mxu0 0.0
        %1060 = vmatpush.msra.mxu0 0.0
        %1061 = vmatpush.msra.mxu0 0.0
        %1062 = vmatpush.msra.mxu0 0.0
        %1063 = vmatpush.msra.mxu0 0.0
        %1064 = vmatpush.msra.mxu0 0.0
        %1065 = vmatpush.msra.mxu0 0.0
        %1066 = vmatpush.msra.mxu0 0.0
        %1067 = vmatpush.msra.mxu0 0.0
        %1068 = vmatpush.msra.mxu0 0.0
        %1069 = vmatpush.msra.mxu0 0.0
        %1070 = vmatpush.msra.mxu0 0.0
        %1071 = vmatpush.msra.mxu0 0.0
        %1072 = vmatpush.msra.mxu0 0.0
        %1073 = vmatpush.msra.mxu0 0.0
        %1074 = vmatpush.msra.mxu0 %v581
        %1075 = vmatmul.f32.gmra.mxu0 %v1057
        %v1076 = vpop.f32.mrf.mxu0
        %v1077 = vadd.f32 0.0, %v1076
        %1078 = vdwg.mxu0
        %v1079 = vadd.f32 %v977, %v1077
        %v1081 = vperm.slane %v582, 0
        %v1083 = vadd.f32 %v1079, %v1081
        %v1084 = vmul.f32 %v611, %v610
        %v1085 = vsel %vm612, %v1084, 0.0
        %v1086 = vrot.slane %v1085, 4
        %v1087 = vadd.f32 %v1085, %v1086
        %v1088 = vrot.slane %v1087, 2
        %v1089 = vadd.f32 %v1087, %v1088
        %v1090 = vrot.slane %v1089, 1
        %v1091 = vadd.f32 %v1089, %v1090
        %v1093 = vsel %vm612, %v1091, 0
        %1095 = vmatpush.msra.mxu0 0.0
        %1096 = vmatpush.msra.mxu0 0.0
        %1097 = vmatpush.msra.mxu0 0.0
        %1098 = vmatpush.msra.mxu0 0.0
        %1099 = vmatpush.msra.mxu0 0.0
        %1100 = vmatpush.msra.mxu0 0.0
        %1101 = vmatpush.msra.mxu0 0.0
        %1102 = vmatpush.msra.mxu0 0.0
        %1103 = vmatpush.msra.mxu0 0.0
        %1104 = vmatpush.msra.mxu0 0.0
        %1105 = vmatpush.msra.mxu0 0.0
        %1106 = vmatpush.msra.mxu0 0.0
        %1107 = vmatpush.msra.mxu0 %v577
        %1108 = vmatpush.msra.mxu0 %v576
        %1109 = vmatpush.msra.mxu0 %v575
        %1110 = vmatpush.msra.mxu0 %v574
        %1111 = vmatmul.f32.gmra.mxu0 %v1093
        %v1112 = vpop.f32.mrf.mxu0
        %v1113 = vadd.f32 0.0, %v1112
        %1114 = vdwg.mxu0
        %v1116 = vsel %vm612, %v1113, 0
        %1118 = vmatpush.msra.mxu0 0.0
        %1119 = vmatpush.msra.mxu0 0.0
        %1120 = vmatpush.msra.mxu0 0.0
        %1121 = vmatpush.msra.mxu0 0.0
        %1122 = vmatpush.msra.mxu0 0.0
        %1123 = vmatpush.msra.mxu0 0.0
        %1124 = vmatpush.msra.mxu0 0.0
        %1125 = vmatpush.msra.mxu0 0.0
        %1126 = vmatpush.msra.mxu0 0.0
        %1127 = vmatpush.msra.mxu0 0.0
        %1128 = vmatpush.msra.mxu0 0.0
        %1129 = vmatpush.msra.mxu0 0.0
        %1130 = vmatpush.msra.mxu0 %v581
        %1131 = vmatpush.msra.mxu0 %v580
        %1132 = vmatpush.msra.mxu0 %v579
        %1133 = vmatpush.msra.mxu0 %v578
        %1134 = vmatmul.f32.gmra.mxu0 %v1116
        %v1135 = vpop.f32.mrf.mxu0
        %v1136 = vadd.f32 0.0, %v1135
        %1137 = vdwg.mxu0
        %v1138 = vperm.slane %v1136, 0
        %v1139 = vmul.f32 %v607, %v1138
        %v1140 = vadd.f32 %v1083, %v1139
        %v1141 = vadd.f32 %v611, %v1140
        %v1142 = vsel %vm612, %v1141, 0.0
        %v1143 = vrot.slane %v1142, 4
        %v1144 = vadd.f32 %v1142, %v1143
        %v1145 = vrot.slane %v1144, 2
        %v1146 = vadd.f32 %v1144, %v1145
        %v1147 = vrot.slane %v1146, 1
        %v1148 = vadd.f32 %v1146, %v1147
        %v1149 = vrcp.pop 8.0
        %v1150 = vmul.f32 8.0, %v1149
        %v1151 = vsub.f32 1.0, %v1150
        %v1152 = vmul.f32 %v1149, %v1151
        %v1153 = vadd.f32 %v1149, %v1152
        %vm1154 = vweird.f32 %v1149
        %v1155 = vsel %vm1154, %v1149, %v1153
        %v1156 = vmul.f32 %v1148, %v1155
        %v1157 = vsub.f32 %v1141, %v1156
        %v1158 = vmul.f32 %v1157, %v1157
        %v1159 = vsel %vm612, %v1158, 0.0
        %v1160 = vrot.slane %v1159, 4
        %v1161 = vadd.f32 %v1159, %v1160
        %v1162 = vrot.slane %v1161, 2
        %v1163 = vadd.f32 %v1161, %v1162
        %v1164 = vrot.slane %v1163, 1
        %v1165 = vadd.f32 %v1163, %v1164
        %v1166 = vmul.f32 %v1165, %v1155
        %v1167 = vadd.f32 %v1166, 1e-05
        %v1168 = vrsqrt.pop %v1167
        %v1169 = vmul.f32 %v1168, %v1167
        %v1170 = vmul.f32 %v1169, %v1168
        %v1171 = vmul.f32 0.5, %v1170
        %v1172 = vsub.f32 1.5, %v1171
        %v1173 = vmul.f32 %v1168, %v1172
        %vm1174 = vweird.f32 %v1167
        %vm1175 = vweird.f32 %v1168
        %vm1176 = vmor %vm1174, %vm1175
        %v1177 = vsel %vm1176, %v1168, %v1173
        %v1178 = vmul.f32 %v1157, %v1177
        %v1180 = vperm.slane %v583, 0
        %v1182 = vmul.f32 %v1178, %v1180
        %v1184 = vperm.slane %v584, 0
        %v1186 = vadd.f32 %v1182, %v1184
        %v1188 = vperm.slane %v589, 0
        %v1191 = vsel %vm612, %v1186, 0
        %1193 = vmatpush.msra.mxu0 0.0
        %1194 = vmatpush.msra.mxu0 0.0
        %1195 = vmatpush.msra.mxu0 0.0
        %1196 = vmatpush.msra.mxu0 0.0
        %1197 = vmatpush.msra.mxu0 0.0
        %1198 = vmatpush.msra.mxu0 0.0
        %1199 = vmatpush.msra.mxu0 0.0
        %1200 = vmatpush.msra.mxu0 0.0
        %1201 = vmatpush.msra.mxu0 0.0
        %1202 = vmatpush.msra.mxu0 0.0
        %1203 = vmatpush.msra.mxu0 0.0
        %1204 = vmatpush.msra.mxu0 0.0
        %1205 = vmatpush.msra.mxu0 %v588
        %1206 = vmatpush.msra.mxu0 %v587
        %1207 = vmatpush.msra.mxu0 %v586
        %1208 = vmatpush.msra.mxu0 %v585
        %1209 = vmatmul.f32.gmra.mxu0 %v1191
        %v1210 = vpop.f32.mrf.mxu0
        %v1211 = vadd.f32 %v1188, %v1210
        %1212 = vdwg.mxu0
        %v1213 = vmul.f32 %v1211, 0.5
        %v1214 = vmul.f32 %v1211, 0.044715
        %v1215 = vmul.f32 %v1214, %v1211
        %v1216 = vmul.f32 %v1215, %v1211
        %v1217 = vadd.f32 %v1211, %v1216
        %v1218 = vmul.f32 %v1217, 0.7978846
        %v1219 = vtanh.pop %v1218
        %v1220 = vadd.f32 %v1219, 1.0
        %v1221 = vmul.f32 %v1213, %v1220
        %v1223 = vperm.slane %v598, 0
        %vm1225 = vcmask 523264
        %v1227 = vsel %vm1225, %v1221, 0
        %1229 = vmatpush.msra.mxu0 0.0
        %1230 = vmatpush.msra.mxu0 0.0
        %1231 = vmatpush.msra.mxu0 0.0
        %1232 = vmatpush.msra.mxu0 0.0
        %1233 = vmatpush.msra.mxu0 0.0
        %1234 = vmatpush.msra.mxu0 0.0
        %1235 = vmatpush.msra.mxu0 0.0
        %1236 = vmatpush.msra.mxu0 0.0
        %1237 = vmatpush.msra.mxu0 %v597
        %1238 = vmatpush.msra.mxu0 %v596
        %1239 = vmatpush.msra.mxu0 %v595
        %1240 = vmatpush.msra.mxu0 %v594
        %1241 = vmatpush.msra.mxu0 %v593
        %1242 = vmatpush.msra.mxu0 %v592
        %1243 = vmatpush.msra.mxu0 %v591
        %1244 = vmatpush.msra.mxu0 %v590
        %1245 = vmatmul.f32.gmra.mxu0 %v1227
        %v1246 = vpop.f32.mrf.mxu0
        %v1247 = vadd.f32 %v1223, %v1246
        %1248 = vdwg.mxu0
        %v1249 = vadd.f32 %v1186, %v1247
        %v1250 = vsel %vm612, %v1249, 0.0
        %v1251 = vrot.slane %v1250, 4
        %v1252 = vadd.f32 %v1250, %v1251
        %v1253 = vrot.slane %v1252, 2
        %v1254 = vadd.f32 %v1252, %v1253
        %v1255 = vrot.slane %v1254, 1
        %v1256 = vadd.f32 %v1254, %v1255
        %v1257 = vmul.f32 %v1256, %v1155
        %v1258 = vsub.f32 %v1249, %v1257
        %v1259 = vmul.f32 %v1258, %v1258
        %v1260 = vsel %vm612, %v1259, 0.0
        %v1261 = vrot.slane %v1260, 4
        %v1262 = vadd.f32 %v1260, %v1261
        %v1263 = vrot.slane %v1262, 2
        %v1264 = vadd.f32 %v1262, %v1263
        %v1265 = vrot.slane %v1264, 1
        %v1266 = vadd.f32 %v1264, %v1265
        %v1267 = vmul.f32 %v1266, %v1155
        %v1268 = vadd.f32 %v1267, 1e-05
        %v1269 = vrsqrt.pop %v1268
        %v1270 = vmul.f32 %v1269, %v1268
        %v1271 = vmul.f32 %v1270, %v1269
        %v1272 = vmul.f32 0.5, %v1271
        %v1273 = vsub.f32 1.5, %v1272
        %v1274 = vmul.f32 %v1269, %v1273
        %vm1275 = vweird.f32 %v1268
        %vm1276 = vweird.f32 %v1269
        %vm1277 = vmor %vm1275, %vm1276
        %v1278 = vsel %vm1277, %v1269, %v1274
        %v1279 = vmul.f32 %v1258, %v1278
        %v1281 = vperm.slane %v599, 0
        %v1283 = vmul.f32 %v1279, %v1281
        %v1285 = vperm.slane %v600, 0
        %v1287 = vadd.f32 %v1283, %v1285
        %1288 = vst.msk [vmem:[%s561] sm:$0xff] %vm612, %v1287
        %s1289 = sand.u32 %s362, 1
        %s1290 = scalar_lea.sflag [#allocation4], %s1289
        %s1291 = sand.u32 %s362, 1
        %s1292 = smul.addr %s1291, 8
        %s1293 = scalar_lea.vmem [#allocation10], %s1292
        // Predicated region
        $region97: #{tpu_custom_call.1} parent=79 // pred_check
          %p1294 = pneg %p372
        $region98: #{tpu_custom_call.1} parent=79 // pred_check_branch
          %1296 = sbr.rel (%p1294) target = $region100
        $region99: #{tpu_custom_call.1} parent=79 // pred_region
          %1298 = vsyncadd %s1290, 0
          %s1299 = smul.addr %s34, 8
          %s1300 = scalar_lea.hbm %s15, %s1299
          %s1302 = sshll.u32 %s1293, 4
          %s1303 = int_to_ptr.vmem [resolvable:$true] %s1302
          %s1304 = sshll.u32 %s1300, 4
          %s1305 = int_to_ptr.hbm [resolvable:$true] %s1304
          %1307 = dma.vmem_to_hbm [thread:$0]  %s1303, 128, %s1305, %s1290
        $region100: #{tpu_custom_call.1} parent=79 // pred_fallthru
          _
      $region80: #{tpu_custom_call.1} parent=5 // pred_fallthru
        _
      %p1308 = scmp.le.s32.totalorder 2, %s29
      // Predicated region
      $region101: #{tpu_custom_call.1} parent=5 // pred_check
        %p1309 = pneg %p1308
      $region102: #{tpu_custom_call.1} parent=5 // pred_check_branch
        %1311 = sbr.rel (%p1309) target = $region104
      $region103: #{tpu_custom_call.1} parent=5 // pred_region
        %s1312 = ssub.s32 %s29, 2
        // Predicated region
        $region105: #{tpu_custom_call.1} parent=103 // pred_check
          %p1313 = pneg %p378
        $region106: #{tpu_custom_call.1} parent=103 // pred_check_branch
          %1315 = sbr.rel (%p1313) target = $region108
        $region107: #{tpu_custom_call.1} parent=103 // pred_region
          %s1316 = sand.u32 %s363, 1
          %s1317 = scalar_lea.sflag [#allocation4], %s1316
          %s1318 = sand.u32 %s363, 1
          %s1319 = smul.addr %s1318, 8
          %s1320 = scalar_lea.vmem [#allocation10], %s1319
          %1322 = dma.done %s1317, 128
        $region108: #{tpu_custom_call.1} parent=103 // pred_fallthru
          _
      $region104: #{tpu_custom_call.1} parent=5 // pred_fallthru
        _
    $region6: #{tpu_custom_call.1} parent=1 // loop_footer
      %s33 = sadd.s32 1, %s29
    $region7: #{tpu_custom_call.1} parent=1 // loop_footer_branch
      %28 = sbr.rel target = $region3
    $region8: #{tpu_custom_call.1} parent=1 // loop_exit
      _
    %1323 = vsyncpa [#allocation3], 1
    %s1324 = scalar_lea.sflag [#allocation3], 1
    %1325 = vsyncpa %s1324, 1
    %1326 = vsyncpa [#allocation6], 1
    %1327 = vsyncpa [#allocation9], 1
    %1328 = vsyncpa [#allocation4], 1
    %s1329 = scalar_lea.sflag [#allocation4], 1
    %1330 = vsyncpa %s1329, 1

</llo_original>
